<compile_context>
chip_gen: v6e
topology: v6e:2x2x1
jax: 0.10.0
libtpu: 0.0.40
codegen_flags: <defaults>
</compile_context>

<pallas_src>
import functools
import math

import jax
import jax.numpy as jnp
from jax import lax
from jax.experimental import pallas as pl
from jax.experimental.pallas import tpu as pltpu

_LANE = 128
_SUBLANE = 8


def _round_up(n, m):
    return ((n + m - 1) // m) * m


def _bilstm_kernel(xf_ref, xb_ref, wif_ref, wib_ref, whf_ref, whb_ref,
                   bf_ref, bb_ref, out_ref,
                   hf_ref, cf_ref, hb_ref, cb_ref,
                   *, seq_len, num_chunks, inner_unroll):
    """One (batch-tile, time-chunk) grid step of the fused bi-directional recurrence.

    xf_ref / xb_ref   : [C, Bt, Dp] bf16  raw inputs (fwd chunk t, bwd chunk Tc-1-t).
    wi*_ref           : [Dp, 4*Hp] bf16   input-projection weights, VMEM resident.
    wh*_ref           : [Hp, 4*Hp] bf16   recurrent weights, VMEM resident.
    b*_ref            : [1, 4*Hp] f32     bias (b_ih + b_hh), VMEM resident.
    out_ref           : [2, Bt, Hp] f32   final h (fwd, bwd), written at last chunk.
    h*/c*_ref         : [Bt, Hp] f32      persistent state across the time grid axis.
    """
    C, _, _ = xf_ref.shape
    Hp = whf_ref.shape[0]
    t = pl.program_id(1)
    # Padded (masked) timesteps only exist when Tc*C != T; static trace-time switch.
    needs_mask = (num_chunks * C) != seq_len

    @pl.when(t == 0)
    def _():
        hf_ref[...] = jnp.zeros_like(hf_ref)
        cf_ref[...] = jnp.zeros_like(cf_ref)
        hb_ref[...] = jnp.zeros_like(hb_ref)
        cb_ref[...] = jnp.zeros_like(cb_ref)

    bias_f = bf_ref[...]
    bias_b = bb_ref[...]

    def cell(x_t, bias, h, c, wi_ref, wh_ref):
        # gates: [Bt, 4Hp], PyTorch gate order i | f | g | o; every gate is a
        # lane-aligned Hp-wide slice.  bf16 MXU matmuls (x@Wi has no dependence on
        # h, so it overlaps the recurrence), f32 accumulation, f32 nonlinearities.
        gates = (jnp.dot(x_t, wi_ref[...], preferred_element_type=jnp.float32)
                 + jnp.dot(h.astype(jnp.bfloat16), wh_ref[...],
                           preferred_element_type=jnp.float32)
                 + bias)
        i = jax.nn.sigmoid(gates[:, 0 * Hp:1 * Hp])
        f = jax.nn.sigmoid(gates[:, 1 * Hp:2 * Hp])
        g = jnp.tanh(gates[:, 2 * Hp:3 * Hp])
        o = jax.nn.sigmoid(gates[:, 3 * Hp:4 * Hp])
        c_new = f * c + i * g
        h_new = o * jnp.tanh(c_new)
        return h_new, c_new

    def step(j, carry):
        # Fwd local step j of chunk t; bwd local step C-1-j of chunk Tc-1-t.
        h_f, c_f, h_b, c_b = carry
        jb = C - 1 - j
        hf_n, cf_n = cell(xf_ref[j], bias_f, h_f, c_f, wif_ref, whf_ref)
        hb_n, cb_n = cell(xb_ref[jb], bias_b, h_b, c_b, wib_ref, whb_ref)
        if needs_mask:
            valid_f = (t * C + j) < seq_len
            valid_b = ((num_chunks - 1 - t) * C + jb) < seq_len
            hf_n = jnp.where(valid_f, hf_n, h_f)
            cf_n = jnp.where(valid_f, cf_n, c_f)
            hb_n = jnp.where(valid_b, hb_n, h_b)
            cb_n = jnp.where(valid_b, cb_n, c_b)
        return hf_n, cf_n, hb_n, cb_n

    carry = (hf_ref[...], cf_ref[...], hb_ref[...], cb_ref[...])

    # fori_loop with a small static inner unroll: bounds vreg live ranges at large
    # Bt while still giving the scheduler 2*U independent cell bodies to interleave.
    U = max(1, min(inner_unroll, C))
    n_main, rem = divmod(C, U)

    def body(i, carry):
        j0 = i * U
        for u in range(U):
            carry = step(j0 + u, carry)
        return carry

    if n_main > 0:
        carry = lax.fori_loop(0, n_main, body, carry)
    for u in range(rem):
        carry = step(n_main * U + u, carry)

    h_f, c_f, h_b, c_b = carry
    hf_ref[...] = h_f
    cf_ref[...] = c_f
    hb_ref[...] = h_b
    cb_ref[...] = c_b

    @pl.when(t == num_chunks - 1)
    def _():
        out_ref[0] = h_f.astype(out_ref.dtype)
        out_ref[1] = h_b.astype(out_ref.dtype)


def _vmem_limit_bytes(C, Bt, Dp, Hp):
    """Derive the scoped-VMEM request from the actual block footprint."""
    bf16, f32 = 2, 4
    x_blocks = 2 * 2 * C * Bt * Dp * bf16                       # 2 dirs, double-buffered
    weights = 2 * 2 * (Dp * 4 * Hp + Hp * 4 * Hp) * bf16        # Wi + Wh, double-buffered
    biases = 2 * 2 * 4 * Hp * f32
    out_block = 2 * 2 * Bt * Hp * f32
    state = 4 * Bt * Hp * f32
    gate_slack = 4 * Bt * 4 * Hp * f32                          # live gate tensors / spills
    total = x_blocks + weights + biases + out_block + state + gate_slack
    # 2x headroom + 4 MiB, floor 16 MiB, cap 48 MiB (safe on v7x's 64 MiB VMEM).
    return int(min(max(2 * total + (4 << 20), 16 << 20), 48 << 20))


@functools.partial(jax.jit,
                   static_argnames=("hidden_dim", "time_chunk", "batch_tile"))
def bilstm_text_encoder(x, wi_f, wh_f, b_f, wi_b, wh_b, b_b, *,
                        hidden_dim, time_chunk=16, batch_tile=64):
    """x: [B, T, D] (batch_first, like the PyTorch module). Returns [B, 2*hidden_dim]."""
    B, T, D = x.shape
    H = hidden_dim
    Hp = wh_f.shape[0]                       # hidden dim padded to 128 lanes
    Dp = wi_f.shape[0]                       # input dim padded to 128 lanes
    assert Hp % _LANE == 0 and wh_f.shape == (Hp, 4 * Hp)
    assert Dp % _LANE == 0 and Dp >= D and wi_f.shape == (Dp, 4 * Hp)

    # ---- batch / time tiling -------------------------------------------------
    # batch_tile: sweep 32/64/128 per chip; ~64 is a good v5e cap (vst/VALU bound).
    Bt = _round_up(max(1, min(batch_tile, B)), _SUBLANE)
    Bp = _round_up(B, Bt)
    # Fixed-size time chunks; the last chunk may be ragged and is masked in-kernel.
    Tc = -(-T // max(1, time_chunk))         # number of chunks
    C = -(-T // Tc)                          # chunk length (minimizes padding)
    Tp = Tc * C

    # ---- input prep (cheap: bf16 cast + pad + time-major transpose of x) ------
    xp = jnp.pad(x.astype(jnp.bfloat16),
                 ((0, Bp - B), (0, Tp - T), (0, Dp - D)))
    x_tm = jnp.transpose(xp, (1, 0, 2))      # [Tp, Bp, Dp], time-major

    kernel = functools.partial(_bilstm_kernel, seq_len=T, num_chunks=Tc,
                               inner_unroll=2)

    grid = (Bp // Bt, Tc)
    x_block = (C, Bt, Dp)

    out = pl.pallas_call(
        kernel,
        out_shape=jax.ShapeDtypeStruct((2, Bp, Hp), jnp.float32),
        grid_spec=pltpu.PrefetchScalarGridSpec(
            num_scalar_prefetch=0,
            grid=grid,
            in_specs=[
                pl.BlockSpec(x_block, lambda b, t: (t, b, 0)),               # x, fwd order
                pl.BlockSpec(x_block, lambda b, t: (Tc - 1 - t, b, 0)),      # x, bwd order
                pl.BlockSpec((Dp, 4 * Hp), lambda b, t: (0, 0)),             # Wi fwd
                pl.BlockSpec((Dp, 4 * Hp), lambda b, t: (0, 0)),             # Wi bwd
                pl.BlockSpec((Hp, 4 * Hp), lambda b, t: (0, 0)),             # Wh fwd
                pl.BlockSpec((Hp, 4 * Hp), lambda b, t: (0, 0)),             # Wh bwd
                pl.BlockSpec((1, 4 * Hp), lambda b, t: (0, 0)),              # bias fwd
                pl.BlockSpec((1, 4 * Hp), lambda b, t: (0, 0)),              # bias bwd
            ],
            out_specs=pl.BlockSpec((2, Bt, Hp), lambda b, t: (0, b, 0)),
            scratch_shapes=[pltpu.VMEM((Bt, Hp), jnp.float32) for _ in range(4)],
        ),
        compiler_params=pltpu.CompilerParams(
            # Batch tiles are independent (megacore / v7x 2-TC); the time axis
            # carries the recurrence and must stay sequential.
            dimension_semantics=("parallel", "arbitrary"),
            vmem_limit_bytes=_vmem_limit_bytes(C, Bt, Dp, Hp),
        ),
    )(x_tm, x_tm, wi_f, wi_b, wh_f, wh_b, b_f, b_b)

    h_fwd = out[0, :B, :H]
    h_bwd = out[1, :B, :H]
    return jnp.concatenate([h_fwd, h_bwd], axis=1).astype(x.dtype)


def init_torch_lstm_params(key, input_dim, hidden_dim):
    """PyTorch nn.LSTM parameter shapes with default init U(-1/sqrt(H), 1/sqrt(H))."""
    bound = 1.0 / math.sqrt(hidden_dim)
    keys = jax.random.split(key, 8)

    def u(k, shape):
        return jax.random.uniform(k, shape, jnp.float32, -bound, bound)

    return dict(
        w_ih_f=u(keys[0], (4 * hidden_dim, input_dim)),
        w_hh_f=u(keys[1], (4 * hidden_dim, hidden_dim)),
        b_ih_f=u(keys[2], (4 * hidden_dim,)),
        b_hh_f=u(keys[3], (4 * hidden_dim,)),
        w_ih_b=u(keys[4], (4 * hidden_dim, input_dim)),
        w_hh_b=u(keys[5], (4 * hidden_dim, hidden_dim)),
        b_ih_b=u(keys[6], (4 * hidden_dim,)),
        b_hh_b=u(keys[7], (4 * hidden_dim,)),
    )


def prepare_kernel_params(p, hidden_dim):
    """PyTorch-layout params -> kernel layout.

    Per direction: wi [Dp, 4Hp] bf16, wh [Hp, 4Hp] bf16, b [1, 4Hp] f32, with
    Hp = round_up(H, 128), Dp = round_up(D, 128), and each gate's H columns at
    lane-aligned offset k*Hp (gate order i|f|g|o).  Padded rows/cols are zero,
    which keeps the padded h/c lanes at exactly 0 throughout the recurrence.
    """
    H = hidden_dim
    Hp = _round_up(H, _LANE)

    def pack(w_ih, w_hh, b_ih, b_hh):
        wi, wh, b = w_ih.T, w_hh.T, b_ih + b_hh          # [D,4H], [H,4H], [4H]
        D = wi.shape[0]
        Dp = _round_up(D, _LANE)
        wi_p = jnp.zeros((Dp, 4 * Hp), jnp.float32)
        wh_p = jnp.zeros((Hp, 4 * Hp), jnp.float32)
        b_p = jnp.zeros((1, 4 * Hp), jnp.float32)
        for k in range(4):
            wi_p = wi_p.at[:D, k * Hp:k * Hp + H].set(wi[:, k * H:(k + 1) * H])
            wh_p = wh_p.at[:H, k * Hp:k * Hp + H].set(wh[:, k * H:(k + 1) * H])
            b_p = b_p.at[:, k * Hp:k * Hp + H].set(b[None, k * H:(k + 1) * H])
        return wi_p.astype(jnp.bfloat16), wh_p.astype(jnp.bfloat16), b_p

    wi_f, wh_f, b_f = pack(p["w_ih_f"], p["w_hh_f"], p["b_ih_f"], p["b_hh_f"])
    wi_b, wh_b, b_b = pack(p["w_ih_b"], p["w_hh_b"], p["b_ih_b"], p["b_hh_b"])
    return wi_f, wh_f, b_f, wi_b, wh_b, b_b


def _reference_bilstm(x, p, hidden_dim):
    """Pure-JAX (lax.scan) reference of the PyTorch forward, math in f32.

    x / Wi / Wh are rounded through bf16 to mirror the kernel's bf16 storage; the
    remaining mismatch is only the kernel's per-step bf16 cast of h."""
    H = hidden_dim
    B = x.shape[0]

    def run(xs, w_ih, w_hh, b_ih, b_hh):
        w_ih = w_ih.astype(jnp.bfloat16).astype(jnp.float32)
        w_hh = w_hh.astype(jnp.bfloat16).astype(jnp.float32)

        def cell(carry, x_t):
            h, c = carry
            gates = x_t @ w_ih.T + h @ w_hh.T + b_ih + b_hh
            i = jax.nn.sigmoid(gates[:, 0 * H:1 * H])
            f = jax.nn.sigmoid(gates[:, 1 * H:2 * H])
            g = jnp.tanh(gates[:, 2 * H:3 * H])
            o = jax.nn.sigmoid(gates[:, 3 * H:4 * H])
            c = f * c + i * g
            h = o * jnp.tanh(c)
            return (h, c), None

        init = (jnp.zeros((B, H), jnp.float32), jnp.zeros((B, H), jnp.float32))
        (h, _), _ = lax.scan(cell, init, xs)
        return h

    x_tm = jnp.transpose(x, (1, 0, 2)).astype(jnp.bfloat16).astype(jnp.float32)
    h_f = run(x_tm, p["w_ih_f"], p["w_hh_f"], p["b_ih_f"], p["b_hh_f"])
    h_b = run(x_tm[::-1], p["w_ih_b"], p["w_hh_b"], p["b_ih_b"], p["b_hh_b"])
    return jnp.concatenate([h_f, h_b], axis=1)


if __name__ == "__main__":
    # Small shapes: batch=2, seq=8, input_dim=16, hidden_dim=32
    B, T, D, H = 2, 8, 16, 32
    key = jax.random.PRNGKey(0)
    kx, kp = jax.random.split(key)

    x = jax.random.normal(kx, (B, T, D), jnp.float32)
    torch_params = init_torch_lstm_params(kp, D, H)
    kernel_params = prepare_kernel_params(torch_params, H)

    ref = _reference_bilstm(x, torch_params, H)

    # Default config (T <= time_chunk -> single, unmasked chunk).
    out = bilstm_text_encoder(x, *kernel_params, hidden_dim=H)
    out = jax.block_until_ready(out)
    assert out.shape == (B, 2 * H), out.shape
    err = float(jnp.max(jnp.abs(out - ref)))
    assert err < 1e-2, f"max abs error {err}"

    # Exercise the ragged (masked) time-chunk path: C=3 does not divide T=8.
    out2 = jax.block_until_ready(
        bilstm_text_encoder(x, *kernel_params, hidden_dim=H,
                            time_chunk=3, batch_tile=8))
    err2 = float(jnp.max(jnp.abs(out2 - ref)))
    assert err2 < 1e-2, f"ragged-chunk max abs error {err2}"

    print("KERNEL_OK")
</pallas_src>

<mosaic_0001>
module attributes {stable_mosaic.version = 11 : i64} {
  func.func @_bilstm_kernel(%arg0: i32, %arg1: i32, %arg2: memref<8x8x128xbf16, #tpu.memory_space<vmem>>, %arg3: memref<8x8x128xbf16, #tpu.memory_space<vmem>>, %arg4: memref<128x512xbf16, #tpu.memory_space<vmem>>, %arg5: memref<128x512xbf16, #tpu.memory_space<vmem>>, %arg6: memref<128x512xbf16, #tpu.memory_space<vmem>>, %arg7: memref<128x512xbf16, #tpu.memory_space<vmem>>, %arg8: memref<1x512xf32, #tpu.memory_space<vmem>>, %arg9: memref<1x512xf32, #tpu.memory_space<vmem>>, %arg10: memref<2x8x128xf32, #tpu.memory_space<vmem>>, %arg11: memref<8x128xf32, #tpu.memory_space<vmem>>, %arg12: memref<8x128xf32, #tpu.memory_space<vmem>>, %arg13: memref<8x128xf32, #tpu.memory_space<vmem>>, %arg14: memref<8x128xf32, #tpu.memory_space<vmem>>) attributes {dimension_semantics = [#tpu.dimension_semantics<parallel>, #tpu.dimension_semantics<arbitrary>], iteration_bounds = array<i64: 1, 1>, scalar_prefetch = 0 : i64, scratch_operands = 4 : i64, tpu.core_type = #tpu.core_type<tc>, window_params = [{transform_indices = @transform_0, window_bounds = array<i64: 8, 8, 128>}, {transform_indices = @transform_1, window_bounds = array<i64: 8, 8, 128>}, {pipeline_mode = #tpu.pipeline_mode<synchronous>, transform_indices = @transform_2, window_bounds = array<i64: 128, 512>}, {pipeline_mode = #tpu.pipeline_mode<synchronous>, transform_indices = @transform_3, window_bounds = array<i64: 128, 512>}, {pipeline_mode = #tpu.pipeline_mode<synchronous>, transform_indices = @transform_4, window_bounds = array<i64: 128, 512>}, {pipeline_mode = #tpu.pipeline_mode<synchronous>, transform_indices = @transform_5, window_bounds = array<i64: 128, 512>}, {pipeline_mode = #tpu.pipeline_mode<synchronous>, transform_indices = @transform_6, window_bounds = array<i64: 1, 512>}, {pipeline_mode = #tpu.pipeline_mode<synchronous>, transform_indices = @transform_7, window_bounds = array<i64: 1, 512>}, {transform_indices = @transform_8, window_bounds = array<i64: 2, 8, 128>}]} {
    %c0_i32 = arith.constant 0 : i32
    %0 = arith.cmpi eq, %arg1, %c0_i32 : i32
    %1 = arith.extui %0 : i1 to i32
    %c0_i32_0 = arith.constant 0 : i32
    %2 = arith.cmpi ne, %1, %c0_i32_0 : i32
    scf.if %2 {
      %cst = arith.constant 0.000000e+00 : f32
      %18 = vector.broadcast %cst : f32 to vector<8x128xf32>
      %c0_24 = arith.constant 0 : index
      %c0_25 = arith.constant 0 : index
      %19 = vector.load %arg11[%c0_24, %c0_25] : memref<8x128xf32, #tpu.memory_space<vmem>>, vector<8x128xf32>
      tpu.vector_store %arg11[%c0_24, %c0_25], %18 {strides = array<i32>} : memref<8x128xf32, #tpu.memory_space<vmem>>, vector<8x128xf32>,
      %cst_26 = arith.constant 0.000000e+00 : f32
      %20 = vector.broadcast %cst_26 : f32 to vector<8x128xf32>
      %c0_27 = arith.constant 0 : index
      %c0_28 = arith.constant 0 : index
      %21 = vector.load %arg12[%c0_27, %c0_28] : memref<8x128xf32, #tpu.memory_space<vmem>>, vector<8x128xf32>
      tpu.vector_store %arg12[%c0_27, %c0_28], %20 {strides = array<i32>} : memref<8x128xf32, #tpu.memory_space<vmem>>, vector<8x128xf32>,
      %cst_29 = arith.constant 0.000000e+00 : f32
      %22 = vector.broadcast %cst_29 : f32 to vector<8x128xf32>
      %c0_30 = arith.constant 0 : index
      %c0_31 = arith.constant 0 : index
      %23 = vector.load %arg13[%c0_30, %c0_31] : memref<8x128xf32, #tpu.memory_space<vmem>>, vector<8x128xf32>
      tpu.vector_store %arg13[%c0_30, %c0_31], %22 {strides = array<i32>} : memref<8x128xf32, #tpu.memory_space<vmem>>, vector<8x128xf32>,
      %cst_32 = arith.constant 0.000000e+00 : f32
      %24 = vector.broadcast %cst_32 : f32 to vector<8x128xf32>
      %c0_33 = arith.constant 0 : index
      %c0_34 = arith.constant 0 : index
      %25 = vector.load %arg14[%c0_33, %c0_34] : memref<8x128xf32, #tpu.memory_space<vmem>>, vector<8x128xf32>
      tpu.vector_store %arg14[%c0_33, %c0_34], %24 {strides = array<i32>} : memref<8x128xf32, #tpu.memory_space<vmem>>, vector<8x128xf32>,
    } else {
    }
    %c0 = arith.constant 0 : index
    %c0_1 = arith.constant 0 : index
    %3 = vector.load %arg8[%c0, %c0_1] : memref<1x512xf32, #tpu.memory_space<vmem>>, vector<1x512xf32>
    %c0_2 = arith.constant 0 : index
    %c0_3 = arith.constant 0 : index
    %4 = vector.load %arg9[%c0_2, %c0_3] : memref<1x512xf32, #tpu.memory_space<vmem>>, vector<1x512xf32>
    %c0_4 = arith.constant 0 : index
    %c0_5 = arith.constant 0 : index
    %5 = vector.load %arg11[%c0_4, %c0_5] : memref<8x128xf32, #tpu.memory_space<vmem>>, vector<8x128xf32>
    %c0_6 = arith.constant 0 : index
    %c0_7 = arith.constant 0 : index
    %6 = vector.load %arg12[%c0_6, %c0_7] : memref<8x128xf32, #tpu.memory_space<vmem>>, vector<8x128xf32>
    %c0_8 = arith.constant 0 : index
    %c0_9 = arith.constant 0 : index
    %7 = vector.load %arg13[%c0_8, %c0_9] : memref<8x128xf32, #tpu.memory_space<vmem>>, vector<8x128xf32>
    %c0_10 = arith.constant 0 : index
    %c0_11 = arith.constant 0 : index
    %8 = vector.load %arg14[%c0_10, %c0_11] : memref<8x128xf32, #tpu.memory_space<vmem>>, vector<8x128xf32>
    %c0_i32_12 = arith.constant 0 : i32
    %c4_i32 = arith.constant 4 : i32
    %9 = arith.addi %c0_i32_12, %c4_i32 : i32
    %c1_i32 = arith.constant 1 : i32
    %10:4 = scf.for %arg15 = %c0_i32_12 to %9 step %c1_i32 iter_args(%arg16 = %5, %arg17 = %6, %arg18 = %7, %arg19 = %8) -> (vector<8x128xf32>, vector<8x128xf32>, vector<8x128xf32>, vector<8x128xf32>)  : i32 {
      %c2_i32 = arith.constant 2 : i32
      %18 = arith.muli %arg15, %c2_i32 : i32
      %c0_i32_24 = arith.constant 0 : i32
      %19 = arith.addi %18, %c0_i32_24 : i32
      %c7_i32 = arith.constant 7 : i32
      %20 = arith.subi %c7_i32, %19 : i32
      %21 = arith.index_cast %19 : i32 to index
      %c0_25 = arith.constant 0 : index
      %c0_26 = arith.constant 0 : index
      %22 = vector.load %arg2[%21, %c0_25, %c0_26] : memref<8x8x128xbf16, #tpu.memory_space<vmem>>, vector<1x8x128xbf16>
      %23 = vector.shape_cast %22 : vector<1x8x128xbf16> to vector<8x128xbf16>
      %c0_27 = arith.constant 0 : index
      %c0_28 = arith.constant 0 : index
      %24 = vector.load %arg4[%c0_27, %c0_28] : memref<128x512xbf16, #tpu.memory_space<vmem>>, vector<128x512xbf16>
      %cst = arith.constant dense<0.000000e+00> : vector<8x512xf32>
      %25 = tpu.matmul %23, %24, %cst {dimension_numbers = #tpu.dot_dimension_numbers<[1], [0], [0], [1], [0, 0, 1, 1], [], []>} : vector<8x128xbf16>, vector<128x512xbf16>, vector<8x512xf32> -> vector<8x512xf32>
      %26 = arith.truncf %arg16 : vector<8x128xf32> to vector<8x128xbf16>
      %c0_29 = arith.constant 0 : index
      %c0_30 = arith.constant 0 : index
      %27 = vector.load %arg6[%c0_29, %c0_30] : memref<128x512xbf16, #tpu.memory_space<vmem>>, vector<128x512xbf16>
      %cst_31 = arith.constant dense<0.000000e+00> : vector<8x512xf32>
      %28 = tpu.matmul %26, %27, %cst_31 {dimension_numbers = #tpu.dot_dimension_numbers<[1], [0], [0], [1], [0, 0, 1, 1], [], []>} : vector<8x128xbf16>, vector<128x512xbf16>, vector<8x512xf32> -> vector<8x512xf32>
      %29 = arith.addf %25, %28 : vector<8x512xf32>
      %30 = vector.broadcast %3 : vector<1x512xf32> to vector<8x512xf32>
      %31 = arith.addf %29, %30 : vector<8x512xf32>
      %32 = vector.extract_strided_slice %31 {offsets = [0, 0], sizes = [8, 128], strides = [1, 1]} : vector<8x512xf32> to vector<8x128xf32>
      %33 = arith.negf %32 : vector<8x128xf32>
      %34 = math.exp %33 : vector<8x128xf32>
      %cst_32 = arith.constant 1.000000e+00 : f32
      %35 = vector.broadcast %cst_32 : f32 to vector<8x128xf32>
      %36 = arith.addf %35, %34 : vector<8x128xf32>
      %37 = arith.divf %35, %36 : vector<8x128xf32>
      %38 = vector.extract_strided_slice %31 {offsets = [0, 128], sizes = [8, 128], strides = [1, 1]} : vector<8x512xf32> to vector<8x128xf32>
      %39 = arith.negf %38 : vector<8x128xf32>
      %40 = math.exp %39 : vector<8x128xf32>
      %cst_33 = arith.constant 1.000000e+00 : f32
      %41 = vector.broadcast %cst_33 : f32 to vector<8x128xf32>
      %42 = arith.addf %41, %40 : vector<8x128xf32>
      %43 = arith.divf %41, %42 : vector<8x128xf32>
      %44 = vector.extract_strided_slice %31 {offsets = [0, 256], sizes = [8, 128], strides = [1, 1]} : vector<8x512xf32> to vector<8x128xf32>
      %45 = math.tanh %44 : vector<8x128xf32>
      %46 = vector.extract_strided_slice %31 {offsets = [0, 384], sizes = [8, 128], strides = [1, 1]} : vector<8x512xf32> to vector<8x128xf32>
      %47 = arith.negf %46 : vector<8x128xf32>
      %48 = math.exp %47 : vector<8x128xf32>
      %cst_34 = arith.constant 1.000000e+00 : f32
      %49 = vector.broadcast %cst_34 : f32 to vector<8x128xf32>
      %50 = arith.addf %49, %48 : vector<8x128xf32>
      %51 = arith.divf %49, %50 : vector<8x128xf32>
      %52 = arith.mulf %43, %arg17 : vector<8x128xf32>
      %53 = arith.mulf %37, %45 : vector<8x128xf32>
      %54 = arith.addf %52, %53 : vector<8x128xf32>
      %55 = math.tanh %54 : vector<8x128xf32>
      %56 = arith.mulf %51, %55 : vector<8x128xf32>
      %57 = arith.index_cast %20 : i32 to index
      %c0_35 = arith.constant 0 : index
      %c0_36 = arith.constant 0 : index
      %58 = vector.load %arg3[%57, %c0_35, %c0_36] : memref<8x8x128xbf16, #tpu.memory_space<vmem>>, vector<1x8x128xbf16>
      %59 = vector.shape_cast %58 : vector<1x8x128xbf16> to vector<8x128xbf16>
      %c0_37 = arith.constant 0 : index
      %c0_38 = arith.constant 0 : index
      %60 = vector.load %arg5[%c0_37, %c0_38] : memref<128x512xbf16, #tpu.memory_space<vmem>>, vector<128x512xbf16>
      %cst_39 = arith.constant dense<0.000000e+00> : vector<8x512xf32>
      %61 = tpu.matmul %59, %60, %cst_39 {dimension_numbers = #tpu.dot_dimension_numbers<[1], [0], [0], [1], [0, 0, 1, 1], [], []>} : vector<8x128xbf16>, vector<128x512xbf16>, vector<8x512xf32> -> vector<8x512xf32>
      %62 = arith.truncf %arg18 : vector<8x128xf32> to vector<8x128xbf16>
      %c0_40 = arith.constant 0 : index
      %c0_41 = arith.constant 0 : index
      %63 = vector.load %arg7[%c0_40, %c0_41] : memref<128x512xbf16, #tpu.memory_space<vmem>>, vector<128x512xbf16>
      %cst_42 = arith.constant dense<0.000000e+00> : vector<8x512xf32>
      %64 = tpu.matmul %62, %63, %cst_42 {dimension_numbers = #tpu.dot_dimension_numbers<[1], [0], [0], [1], [0, 0, 1, 1], [], []>} : vector<8x128xbf16>, vector<128x512xbf16>, vector<8x512xf32> -> vector<8x512xf32>
      %65 = arith.addf %61, %64 : vector<8x512xf32>
      %66 = vector.broadcast %4 : vector<1x512xf32> to vector<8x512xf32>
      %67 = arith.addf %65, %66 : vector<8x512xf32>
      %68 = vector.extract_strided_slice %67 {offsets = [0, 0], sizes = [8, 128], strides = [1, 1]} : vector<8x512xf32> to vector<8x128xf32>
      %69 = arith.negf %68 : vector<8x128xf32>
      %70 = math.exp %69 : vector<8x128xf32>
      %cst_43 = arith.constant 1.000000e+00 : f32
      %71 = vector.broadcast %cst_43 : f32 to vector<8x128xf32>
      %72 = arith.addf %71, %70 : vector<8x128xf32>
      %73 = arith.divf %71, %72 : vector<8x128xf32>
      %74 = vector.extract_strided_slice %67 {offsets = [0, 128], sizes = [8, 128], strides = [1, 1]} : vector<8x512xf32> to vector<8x128xf32>
      %75 = arith.negf %74 : vector<8x128xf32>
      %76 = math.exp %75 : vector<8x128xf32>
      %cst_44 = arith.constant 1.000000e+00 : f32
      %77 = vector.broadcast %cst_44 : f32 to vector<8x128xf32>
      %78 = arith.addf %77, %76 : vector<8x128xf32>
      %79 = arith.divf %77, %78 : vector<8x128xf32>
      %80 = vector.extract_strided_slice %67 {offsets = [0, 256], sizes = [8, 128], strides = [1, 1]} : vector<8x512xf32> to vector<8x128xf32>
      %81 = math.tanh %80 : vector<8x128xf32>
      %82 = vector.extract_strided_slice %67 {offsets = [0, 384], sizes = [8, 128], strides = [1, 1]} : vector<8x512xf32> to vector<8x128xf32>
      %83 = arith.negf %82 : vector<8x128xf32>
      %84 = math.exp %83 : vector<8x128xf32>
      %cst_45 = arith.constant 1.000000e+00 : f32
      %85 = vector.broadcast %cst_45 : f32 to vector<8x128xf32>
      %86 = arith.addf %85, %84 : vector<8x128xf32>
      %87 = arith.divf %85, %86 : vector<8x128xf32>
      %88 = arith.mulf %79, %arg19 : vector<8x128xf32>
      %89 = arith.mulf %73, %81 : vector<8x128xf32>
      %90 = arith.addf %88, %89 : vector<8x128xf32>
      %91 = math.tanh %90 : vector<8x128xf32>
      %92 = arith.mulf %87, %91 : vector<8x128xf32>
      %c1_i32_46 = arith.constant 1 : i32
      %93 = arith.addi %18, %c1_i32_46 : i32
      %c7_i32_47 = arith.constant 7 : i32
      %94 = arith.subi %c7_i32_47, %93 : i32
      %95 = arith.index_cast %93 : i32 to index
      %c0_48 = arith.constant 0 : index
      %c0_49 = arith.constant 0 : index
      %96 = vector.load %arg2[%95, %c0_48, %c0_49] : memref<8x8x128xbf16, #tpu.memory_space<vmem>>, vector<1x8x128xbf16>
      %97 = vector.shape_cast %96 : vector<1x8x128xbf16> to vector<8x128xbf16>
      %c0_50 = arith.constant 0 : index
      %c0_51 = arith.constant 0 : index
      %98 = vector.load %arg4[%c0_50, %c0_51] : memref<128x512xbf16, #tpu.memory_space<vmem>>, vector<128x512xbf16>
      %cst_52 = arith.constant dense<0.000000e+00> : vector<8x512xf32>
      %99 = tpu.matmul %97, %98, %cst_52 {dimension_numbers = #tpu.dot_dimension_numbers<[1], [0], [0], [1], [0, 0, 1, 1], [], []>} : vector<8x128xbf16>, vector<128x512xbf16>, vector<8x512xf32> -> vector<8x512xf32>
      %100 = arith.truncf %56 : vector<8x128xf32> to vector<8x128xbf16>
      %c0_53 = arith.constant 0 : index
      %c0_54 = arith.constant 0 : index
      %101 = vector.load %arg6[%c0_53, %c0_54] : memref<128x512xbf16, #tpu.memory_space<vmem>>, vector<128x512xbf16>
      %cst_55 = arith.constant dense<0.000000e+00> : vector<8x512xf32>
      %102 = tpu.matmul %100, %101, %cst_55 {dimension_numbers = #tpu.dot_dimension_numbers<[1], [0], [0], [1], [0, 0, 1, 1], [], []>} : vector<8x128xbf16>, vector<128x512xbf16>, vector<8x512xf32> -> vector<8x512xf32>
      %103 = arith.addf %99, %102 : vector<8x512xf32>
      %104 = vector.broadcast %3 : vector<1x512xf32> to vector<8x512xf32>
      %105 = arith.addf %103, %104 : vector<8x512xf32>
      %106 = vector.extract_strided_slice %105 {offsets = [0, 0], sizes = [8, 128], strides = [1, 1]} : vector<8x512xf32> to vector<8x128xf32>
      %107 = arith.negf %106 : vector<8x128xf32>
      %108 = math.exp %107 : vector<8x128xf32>
      %cst_56 = arith.constant 1.000000e+00 : f32
      %109 = vector.broadcast %cst_56 : f32 to vector<8x128xf32>
      %110 = arith.addf %109, %108 : vector<8x128xf32>
      %111 = arith.divf %109, %110 : vector<8x128xf32>
      %112 = vector.extract_strided_slice %105 {offsets = [0, 128], sizes = [8, 128], strides = [1, 1]} : vector<8x512xf32> to vector<8x128xf32>
      %113 = arith.negf %112 : vector<8x128xf32>
      %114 = math.exp %113 : vector<8x128xf32>
      %cst_57 = arith.constant 1.000000e+00 : f32
      %115 = vector.broadcast %cst_57 : f32 to vector<8x128xf32>
      %116 = arith.addf %115, %114 : vector<8x128xf32>
      %117 = arith.divf %115, %116 : vector<8x128xf32>
      %118 = vector.extract_strided_slice %105 {offsets = [0, 256], sizes = [8, 128], strides = [1, 1]} : vector<8x512xf32> to vector<8x128xf32>
      %119 = math.tanh %118 : vector<8x128xf32>
      %120 = vector.extract_strided_slice %105 {offsets = [0, 384], sizes = [8, 128], strides = [1, 1]} : vector<8x512xf32> to vector<8x128xf32>
      %121 = arith.negf %120 : vector<8x128xf32>
      %122 = math.exp %121 : vector<8x128xf32>
      %cst_58 = arith.constant 1.000000e+00 : f32
      %123 = vector.broadcast %cst_58 : f32 to vector<8x128xf32>
      %124 = arith.addf %123, %122 : vector<8x128xf32>
      %125 = arith.divf %123, %124 : vector<8x128xf32>
      %126 = arith.mulf %117, %54 : vector<8x128xf32>
      %127 = arith.mulf %111, %119 : vector<8x128xf32>
      %128 = arith.addf %126, %127 : vector<8x128xf32>
      %129 = math.tanh %128 : vector<8x128xf32>
      %130 = arith.mulf %125, %129 : vector<8x128xf32>
      %131 = arith.index_cast %94 : i32 to index
      %c0_59 = arith.constant 0 : index
      %c0_60 = arith.constant 0 : index
      %132 = vector.load %arg3[%131, %c0_59, %c0_60] : memref<8x8x128xbf16, #tpu.memory_space<vmem>>, vector<1x8x128xbf16>
      %133 = vector.shape_cast %132 : vector<1x8x128xbf16> to vector<8x128xbf16>
      %c0_61 = arith.constant 0 : index
      %c0_62 = arith.constant 0 : index
      %134 = vector.load %arg5[%c0_61, %c0_62] : memref<128x512xbf16, #tpu.memory_space<vmem>>, vector<128x512xbf16>
      %cst_63 = arith.constant dense<0.000000e+00> : vector<8x512xf32>
      %135 = tpu.matmul %133, %134, %cst_63 {dimension_numbers = #tpu.dot_dimension_numbers<[1], [0], [0], [1], [0, 0, 1, 1], [], []>} : vector<8x128xbf16>, vector<128x512xbf16>, vector<8x512xf32> -> vector<8x512xf32>
      %136 = arith.truncf %92 : vector<8x128xf32> to vector<8x128xbf16>
      %c0_64 = arith.constant 0 : index
      %c0_65 = arith.constant 0 : index
      %137 = vector.load %arg7[%c0_64, %c0_65] : memref<128x512xbf16, #tpu.memory_space<vmem>>, vector<128x512xbf16>
      %cst_66 = arith.constant dense<0.000000e+00> : vector<8x512xf32>
      %138 = tpu.matmul %136, %137, %cst_66 {dimension_numbers = #tpu.dot_dimension_numbers<[1], [0], [0], [1], [0, 0, 1, 1], [], []>} : vector<8x128xbf16>, vector<128x512xbf16>, vector<8x512xf32> -> vector<8x512xf32>
      %139 = arith.addf %135, %138 : vector<8x512xf32>
      %140 = vector.broadcast %4 : vector<1x512xf32> to vector<8x512xf32>
      %141 = arith.addf %139, %140 : vector<8x512xf32>
      %142 = vector.extract_strided_slice %141 {offsets = [0, 0], sizes = [8, 128], strides = [1, 1]} : vector<8x512xf32> to vector<8x128xf32>
      %143 = arith.negf %142 : vector<8x128xf32>
      %144 = math.exp %143 : vector<8x128xf32>
      %cst_67 = arith.constant 1.000000e+00 : f32
      %145 = vector.broadcast %cst_67 : f32 to vector<8x128xf32>
      %146 = arith.addf %145, %144 : vector<8x128xf32>
      %147 = arith.divf %145, %146 : vector<8x128xf32>
      %148 = vector.extract_strided_slice %141 {offsets = [0, 128], sizes = [8, 128], strides = [1, 1]} : vector<8x512xf32> to vector<8x128xf32>
      %149 = arith.negf %148 : vector<8x128xf32>
      %150 = math.exp %149 : vector<8x128xf32>
      %cst_68 = arith.constant 1.000000e+00 : f32
      %151 = vector.broadcast %cst_68 : f32 to vector<8x128xf32>
      %152 = arith.addf %151, %150 : vector<8x128xf32>
      %153 = arith.divf %151, %152 : vector<8x128xf32>
      %154 = vector.extract_strided_slice %141 {offsets = [0, 256], sizes = [8, 128], strides = [1, 1]} : vector<8x512xf32> to vector<8x128xf32>
      %155 = math.tanh %154 : vector<8x128xf32>
      %156 = vector.extract_strided_slice %141 {offsets = [0, 384], sizes = [8, 128], strides = [1, 1]} : vector<8x512xf32> to vector<8x128xf32>
      %157 = arith.negf %156 : vector<8x128xf32>
      %158 = math.exp %157 : vector<8x128xf32>
      %cst_69 = arith.constant 1.000000e+00 : f32
      %159 = vector.broadcast %cst_69 : f32 to vector<8x128xf32>
      %160 = arith.addf %159, %158 : vector<8x128xf32>
      %161 = arith.divf %159, %160 : vector<8x128xf32>
      %162 = arith.mulf %153, %90 : vector<8x128xf32>
      %163 = arith.mulf %147, %155 : vector<8x128xf32>
      %164 = arith.addf %162, %163 : vector<8x128xf32>
      %165 = math.tanh %164 : vector<8x128xf32>
      %166 = arith.mulf %161, %165 : vector<8x128xf32>
      scf.yield %130, %128, %166, %164 : vector<8x128xf32>, vector<8x128xf32>, vector<8x128xf32>, vector<8x128xf32>
    }
    %c4_i32_13 = arith.constant 4 : i32
    %c0_14 = arith.constant 0 : index
    %c0_15 = arith.constant 0 : index
    %11 = vector.load %arg11[%c0_14, %c0_15] : memref<8x128xf32, #tpu.memory_space<vmem>>, vector<8x128xf32>
    tpu.vector_store %arg11[%c0_14, %c0_15], %10#0 {strides = array<i32>} : memref<8x128xf32, #tpu.memory_space<vmem>>, vector<8x128xf32>,
    %c0_16 = arith.constant 0 : index
    %c0_17 = arith.constant 0 : index
    %12 = vector.load %arg12[%c0_16, %c0_17] : memref<8x128xf32, #tpu.memory_space<vmem>>, vector<8x128xf32>
    tpu.vector_store %arg12[%c0_16, %c0_17], %10#1 {strides = array<i32>} : memref<8x128xf32, #tpu.memory_space<vmem>>, vector<8x128xf32>,
    %c0_18 = arith.constant 0 : index
    %c0_19 = arith.constant 0 : index
    %13 = vector.load %arg13[%c0_18, %c0_19] : memref<8x128xf32, #tpu.memory_space<vmem>>, vector<8x128xf32>
    tpu.vector_store %arg13[%c0_18, %c0_19], %10#2 {strides = array<i32>} : memref<8x128xf32, #tpu.memory_space<vmem>>, vector<8x128xf32>,
    %c0_20 = arith.constant 0 : index
    %c0_21 = arith.constant 0 : index
    %14 = vector.load %arg14[%c0_20, %c0_21] : memref<8x128xf32, #tpu.memory_space<vmem>>, vector<8x128xf32>
    tpu.vector_store %arg14[%c0_20, %c0_21], %10#3 {strides = array<i32>} : memref<8x128xf32, #tpu.memory_space<vmem>>, vector<8x128xf32>,
    %c0_i32_22 = arith.constant 0 : i32
    %15 = arith.cmpi eq, %arg1, %c0_i32_22 : i32
    %16 = arith.extui %15 : i1 to i32
    %c0_i32_23 = arith.constant 0 : i32
    %17 = arith.cmpi ne, %16, %c0_i32_23 : i32
    scf.if %17 {
      %c0_24 = arith.constant 0 : index
      %c0_25 = arith.constant 0 : index
      %c0_26 = arith.constant 0 : index
      %18 = vector.load %arg10[%c0_24, %c0_25, %c0_26] : memref<2x8x128xf32, #tpu.memory_space<vmem>>, vector<1x8x128xf32>
      %19 = vector.shape_cast %18 : vector<1x8x128xf32> to vector<8x128xf32>
      %20 = vector.shape_cast %10#0 : vector<8x128xf32> to vector<1x8x128xf32>
      tpu.vector_store %arg10[%c0_24, %c0_25, %c0_26], %20 {strides = array<i32>} : memref<2x8x128xf32, #tpu.memory_space<vmem>>, vector<1x8x128xf32>,
      %c1 = arith.constant 1 : index
      %c0_27 = arith.constant 0 : index
      %c0_28 = arith.constant 0 : index
      %21 = vector.load %arg10[%c1, %c0_27, %c0_28] : memref<2x8x128xf32, #tpu.memory_space<vmem>>, vector<1x8x128xf32>
      %22 = vector.shape_cast %21 : vector<1x8x128xf32> to vector<8x128xf32>
      %23 = vector.shape_cast %10#2 : vector<8x128xf32> to vector<1x8x128xf32>
      tpu.vector_store %arg10[%c1, %c0_27, %c0_28], %23 {strides = array<i32>} : memref<2x8x128xf32, #tpu.memory_space<vmem>>, vector<1x8x128xf32>,
    } else {
    }
    return
  }
  func.func @transform_0(%arg0: i32, %arg1: i32) -> (i32, i32, i32) {
    %c0_i32 = arith.constant 0 : i32
    %c0_i32_0 = arith.constant 0 : i32
    return %arg1, %arg0, %c0_i32 : i32, i32, i32
  }
  func.func @transform_1(%arg0: i32, %arg1: i32) -> (i32, i32, i32) {
    %c0_i32 = arith.constant 0 : i32
    %0 = arith.subi %c0_i32, %arg1 : i32
    %c0_i32_0 = arith.constant 0 : i32
    %c0_i32_1 = arith.constant 0 : i32
    return %0, %arg0, %c0_i32_0 : i32, i32, i32
  }
  func.func @transform_2(%arg0: i32, %arg1: i32) -> (i32, i32) {
    %c0_i32 = arith.constant 0 : i32
    %c0_i32_0 = arith.constant 0 : i32
    %c0_i32_1 = arith.constant 0 : i32
    return %c0_i32, %c0_i32_0 : i32, i32
  }
  func.func @transform_3(%arg0: i32, %arg1: i32) -> (i32, i32) {
    %c0_i32 = arith.constant 0 : i32
    %c0_i32_0 = arith.constant 0 : i32
    %c0_i32_1 = arith.constant 0 : i32
    return %c0_i32, %c0_i32_0 : i32, i32
  }
  func.func @transform_4(%arg0: i32, %arg1: i32) -> (i32, i32) {
    %c0_i32 = arith.constant 0 : i32
    %c0_i32_0 = arith.constant 0 : i32
    %c0_i32_1 = arith.constant 0 : i32
    return %c0_i32, %c0_i32_0 : i32, i32
  }
  func.func @transform_5(%arg0: i32, %arg1: i32) -> (i32, i32) {
    %c0_i32 = arith.constant 0 : i32
    %c0_i32_0 = arith.constant 0 : i32
    %c0_i32_1 = arith.constant 0 : i32
    return %c0_i32, %c0_i32_0 : i32, i32
  }
  func.func @transform_6(%arg0: i32, %arg1: i32) -> (i32, i32) {
    %c0_i32 = arith.constant 0 : i32
    %c0_i32_0 = arith.constant 0 : i32
    %c0_i32_1 = arith.constant 0 : i32
    return %c0_i32, %c0_i32_0 : i32, i32
  }
  func.func @transform_7(%arg0: i32, %arg1: i32) -> (i32, i32) {
    %c0_i32 = arith.constant 0 : i32
    %c0_i32_0 = arith.constant 0 : i32
    %c0_i32_1 = arith.constant 0 : i32
    return %c0_i32, %c0_i32_0 : i32, i32
  }
  func.func @transform_8(%arg0: i32, %arg1: i32) -> (i32, i32, i32) {
    %c0_i32 = arith.constant 0 : i32
    %c0_i32_0 = arith.constant 0 : i32
    %c0_i32_1 = arith.constant 0 : i32
    return %c0_i32, %arg0, %c0_i32_0 : i32, i32, i32
  }
}

</mosaic_0001>

<llo_original>
// kernel: bilstm_text_encoder.1
$region0: #{bilstm_text_encoder.1}
  #allocation0 [shape = 'u32[]', space=smem, size = 0x4, offset = 0x4, fixed_abs, tag = 'smem constant byte address 0x4 - core index']
  #allocation1 [shape = 'u32[144,128]{1,0:T(1,128)}', space=vmem, size = 0x12000, scoped, tag = 'internal scratch']
  #allocation2 [shape = 'f32[8,128]{1,0:T(8,128)}', space=vmem, size = 0x1000, scoped, tag = 'scratch operand']
  #allocation3 [shape = 'f32[8,128]{1,0:T(8,128)}', space=vmem, size = 0x1000, scoped, tag = 'scratch operand']
  #allocation4 [shape = 'f32[8,128]{1,0:T(8,128)}', space=vmem, size = 0x1000, scoped, tag = 'scratch operand']
  #allocation5 [shape = 'f32[8,128]{1,0:T(8,128)}', space=vmem, size = 0x1000, scoped, tag = 'scratch operand']
  %s0 = inlined_call_operand.vmem [shape: bf16[8,8,128], index: 0, kind: input, shape index: {}, may-alias: {0,1}]
  %s1 = inlined_call_operand.vmem [shape: bf16[8,8,128], index: 1, kind: input, shape index: {}, may-alias: {0,1}]
  %s2 = inlined_call_operand.hbm [shape: bf16[128,512], index: 2, kind: input, shape index: {}]
  %s3 = inlined_call_operand.hbm [shape: bf16[128,512], index: 3, kind: input, shape index: {}]
  %s4 = inlined_call_operand.hbm [shape: bf16[128,512], index: 4, kind: input, shape index: {}]
  %s5 = inlined_call_operand.hbm [shape: bf16[128,512], index: 5, kind: input, shape index: {}]
  %s6 = inlined_call_operand.vmem [shape: f32[1,512], index: 6, kind: input, shape index: {}]
  %s7 = inlined_call_operand.vmem [shape: f32[1,512], index: 7, kind: input, shape index: {}]
  %s8 = inlined_call_operand.vmem [shape: f32[2,8,128], index: 8, kind: output, shape index: {}]
  %s9 = sld [smem:[#allocation0]]
  $region73: #{bilstm_text_encoder.1} parent=0
    _
  %s11 = ssub.s32 1, %s9
  %s12 = scalar_select 0, %s11, %s9
  $region1: #{bilstm_text_encoder.1} parent=0
    #allocation6 [shape = 'u8[131072]{0}', space=vmem, size = 0x20000, scoped, tag = 'input window, operand 2, single buffered']
    #allocation7 [shape = 's32[1]{0}', space=sflag, size = 0x4, scoped, tag = 'scoped memory for bilstm_text_encoder.1']
    #allocation8 [shape = 'u8[131072]{0}', space=vmem, size = 0x20000, scoped, tag = 'input window, operand 3, single buffered']
    #allocation9 [shape = 's32[1]{0}', space=sflag, size = 0x4, scoped, tag = 'scoped memory for bilstm_text_encoder.1']
    #allocation10 [shape = 'u8[131072]{0}', space=vmem, size = 0x20000, scoped, tag = 'input window, operand 4, single buffered']
    #allocation11 [shape = 'u8[131072]{0}', space=vmem, size = 0x20000, scoped, tag = 'input window, operand 5, single buffered']
    #allocation12 [shape = 's32[1]{0}', space=sflag, size = 0x4, scoped, tag = 'scoped memory for bilstm_text_encoder.1']
    %13 = vsyncpa [#allocation7], 0
    %14 = vsyncpa [#allocation9], 0
    %15 = vsyncpa [#allocation12], 0
    // Predicated region
    $region2: #{bilstm_text_encoder.1} parent=1 // pred_check
      _
    $region3: #{bilstm_text_encoder.1} parent=1 // pred_check_branch
      %17 = sbr.rel (0) target = $region5
    $region4: #{bilstm_text_encoder.1} parent=1 // pred_region
      _
    $region5: #{bilstm_text_encoder.1} parent=1 // pred_fallthru
      _
    // Predicated region
    $region6: #{bilstm_text_encoder.1} parent=1 // pred_check
      _
    $region7: #{bilstm_text_encoder.1} parent=1 // pred_check_branch
      %19 = sbr.rel (0) target = $region9
    $region8: #{bilstm_text_encoder.1} parent=1 // pred_region
      %s20 = ssub.s32 0, 0
      %s21 = smul.u32 8, %s20
      %p22 = scmp.lt.s32.totalorder %s21, 7
      %s23 = scalar_select %p22, %s21, 7
      %s24 = smul.addr %s23, 4
      %s25 = scalar_lea.vmem %s1, %s24
      %s26 = ssub.s32 0, 0
      %s27 = smul.u32 8, %s26
    $region9: #{bilstm_text_encoder.1} parent=1 // pred_fallthru
      _
    // Predicated region
    $region10: #{bilstm_text_encoder.1} parent=1 // pred_check
      _
    $region11: #{bilstm_text_encoder.1} parent=1 // pred_check_branch
      %29 = sbr.rel (0) target = $region13
    $region12: #{bilstm_text_encoder.1} parent=1 // pred_region
      %s31 = ssub.s32 4096, 4096
      %32 = vsyncadd [#allocation7], %s31
      %s33 = sshll.u32 [#allocation6], 4
      %s34 = int_to_ptr.vmem [resolvable:$true] %s33
      %39 = dma.hbm_to_vmem [thread:$0]  %s2, 4096, %s34, [#allocation7], 256, 256, 16
    $region13: #{bilstm_text_encoder.1} parent=1 // pred_fallthru
      _
    // Predicated region
    $region14: #{bilstm_text_encoder.1} parent=1 // pred_check
      _
    $region15: #{bilstm_text_encoder.1} parent=1 // pred_check_branch
      %41 = sbr.rel (0) target = $region17
    $region16: #{bilstm_text_encoder.1} parent=1 // pred_region
      %s43 = ssub.s32 4096, 4096
      %44 = vsyncadd [#allocation9], %s43
      %s45 = sshll.u32 [#allocation8], 4
      %s46 = int_to_ptr.vmem [resolvable:$true] %s45
      %51 = dma.hbm_to_vmem [thread:$0]  %s3, 4096, %s46, [#allocation9], 256, 256, 16
    $region17: #{bilstm_text_encoder.1} parent=1 // pred_fallthru
      _
    // Predicated region
    $region18: #{bilstm_text_encoder.1} parent=1 // pred_check
      _
    $region19: #{bilstm_text_encoder.1} parent=1 // pred_check_branch
      %53 = sbr.rel (0) target = $region21
    $region20: #{bilstm_text_encoder.1} parent=1 // pred_region
      %s55 = ssub.s32 4096, 4096
      %56 = vsyncadd [#allocation9], %s55
      %s57 = sshll.u32 [#allocation10], 4
      %s58 = int_to_ptr.vmem [resolvable:$true] %s57
      %63 = dma.hbm_to_vmem [thread:$0]  %s4, 4096, %s58, [#allocation9], 256, 256, 16
    $region21: #{bilstm_text_encoder.1} parent=1 // pred_fallthru
      _
    // Predicated region
    $region22: #{bilstm_text_encoder.1} parent=1 // pred_check
      _
    $region23: #{bilstm_text_encoder.1} parent=1 // pred_check_branch
      %65 = sbr.rel (0) target = $region25
    $region24: #{bilstm_text_encoder.1} parent=1 // pred_region
      %s67 = ssub.s32 4096, 4096
      %68 = vsyncadd [#allocation12], %s67
      %s69 = sshll.u32 [#allocation11], 4
      %s70 = int_to_ptr.vmem [resolvable:$true] %s69
      %75 = dma.hbm_to_vmem [thread:$0]  %s5, 4096, %s70, [#allocation12], 256, 256, 16
    $region25: #{bilstm_text_encoder.1} parent=1 // pred_fallthru
      _
    // Predicated region
    $region26: #{bilstm_text_encoder.1} parent=1 // pred_check
      _
    $region27: #{bilstm_text_encoder.1} parent=1 // pred_check_branch
      %77 = sbr.rel (0) target = $region29
    $region28: #{bilstm_text_encoder.1} parent=1 // pred_region
      _
    $region29: #{bilstm_text_encoder.1} parent=1 // pred_fallthru
      _
    // Predicated region
    $region30: #{bilstm_text_encoder.1} parent=1 // pred_check
      _
    $region31: #{bilstm_text_encoder.1} parent=1 // pred_check_branch
      %79 = sbr.rel (0) target = $region33
    $region32: #{bilstm_text_encoder.1} parent=1 // pred_region
      _
    $region33: #{bilstm_text_encoder.1} parent=1 // pred_fallthru
      _
    // Predicated region
    $region34: #{bilstm_text_encoder.1} parent=1 // pred_check
      _
    $region35: #{bilstm_text_encoder.1} parent=1 // pred_check_branch
      %81 = sbr.rel (0) target = $region37
    $region36: #{bilstm_text_encoder.1} parent=1 // pred_region
      %82 = dma.done [#allocation7], 4096
    $region37: #{bilstm_text_encoder.1} parent=1 // pred_fallthru
      _
    // Predicated region
    $region38: #{bilstm_text_encoder.1} parent=1 // pred_check
      _
    $region39: #{bilstm_text_encoder.1} parent=1 // pred_check_branch
      %84 = sbr.rel (0) target = $region41
    $region40: #{bilstm_text_encoder.1} parent=1 // pred_region
      %85 = dma.done [#allocation9], 4096
    $region41: #{bilstm_text_encoder.1} parent=1 // pred_fallthru
      _
    // Predicated region
    $region42: #{bilstm_text_encoder.1} parent=1 // pred_check
      _
    $region43: #{bilstm_text_encoder.1} parent=1 // pred_check_branch
      %87 = sbr.rel (0) target = $region45
    $region44: #{bilstm_text_encoder.1} parent=1 // pred_region
      %88 = dma.done [#allocation9], 4096
    $region45: #{bilstm_text_encoder.1} parent=1 // pred_fallthru
      _
    // Predicated region
    $region46: #{bilstm_text_encoder.1} parent=1 // pred_check
      _
    $region47: #{bilstm_text_encoder.1} parent=1 // pred_check_branch
      %90 = sbr.rel (0) target = $region49
    $region48: #{bilstm_text_encoder.1} parent=1 // pred_region
      %91 = dma.done [#allocation12], 4096
    $region49: #{bilstm_text_encoder.1} parent=1 // pred_fallthru
      _
    %s92 = ssub.s32 0, 0
    %s93 = smul.u32 8, %s92
    %p94 = scmp.lt.s32.totalorder %s93, 7
    %s95 = scalar_select %p94, %s93, 7
    %s96 = smul.addr %s95, 4
    %s97 = scalar_lea.vmem %s1, %s96
    %s98 = ssub.s32 0, 0
    %s99 = smul.u32 8, %s98
    %p100 = scmp.lt.s32.totalorder %s99, 7
    %s101 = scalar_select %p100, %s99, 7
    %s102 = smul.addr %s101, 4
    %s103 = scalar_lea.vmem %s1, %s102
    %s104 = ssub.s32 0, 0
    %s105 = smul.u32 8, %s104
    %p107 = scmp.eq.s32.totalorder 0, 0
    // Predicated region
    $region50: #{bilstm_text_encoder.1} parent=1 // pred_check
      %p108 = pneg %p107
    $region51: #{bilstm_text_encoder.1} parent=1 // pred_check_branch
      %110 = sbr.rel (%p108) target = $region53
    $region52: #{bilstm_text_encoder.1} parent=1 // pred_region
      %111 = vst [vmem:[#allocation2] sm:$0xff] 0.0
      %112 = vst [vmem:[#allocation3] sm:$0xff] 0.0
      %113 = vst [vmem:[#allocation4] sm:$0xff] 0.0
      %114 = vst [vmem:[#allocation5] sm:$0xff] 0.0
    $region53: #{bilstm_text_encoder.1} parent=1 // pred_fallthru
      _
    %v115 = vld [vmem:[%s6] sm:$0xf]
    %v116 = vld [vmem:[%s7] sm:$0xf]
    %v117 = vld [vmem:[#allocation2] sm:$0xff]
    %v118 = vld [vmem:[#allocation3] sm:$0xff]
    %v119 = vld [vmem:[#allocation4] sm:$0xff]
    %v120 = vld [vmem:[#allocation5] sm:$0xff]
    loop: start=0, step=1, limit=4
    $region54: #{bilstm_text_encoder.1} parent=1 // loop_pre_header
      _
    $region55: #{bilstm_text_encoder.1} parent=1 // loop_header
      %s122 = sphi 0, %s126
      %p123 = scmp.ge.s32.totalorder %s122, 4
      %v127 = vphi %v117, %v1532
      %v128 = vphi %v118, %v1530
      %v129 = vphi %v119, %v1728
      %v130 = vphi %v120, %v1726
    $region56: #{bilstm_text_encoder.1} parent=1 // loop_header_branch
      %125 = sbr.rel (%p123) target = $region60
    $region57: #{bilstm_text_encoder.1} parent=1 // loop_body
      %s131 = smul.u32 %s122, 2
      %s132 = ssub.s32 7, %s131
      %s133 = smul.addr %s131, 4
      %s134 = scalar_lea.vmem %s0, %s133
      %v135 = vld [vmem:[%s134] sm:$0xf]
      %v136 = vld [vmem:[#allocation6] sm:$0xff]
      %v137 = vld [vmem:[#allocation6 + $0x8] sm:$0xff]
      %v138 = vld [vmem:[#allocation6 + $0x10] sm:$0xff]
      %v139 = vld [vmem:[#allocation6 + $0x18] sm:$0xff]
      %v140 = vld [vmem:[#allocation6 + $0x20] sm:$0xff]
      %v141 = vld [vmem:[#allocation6 + $0x28] sm:$0xff]
      %v142 = vld [vmem:[#allocation6 + $0x30] sm:$0xff]
      %v143 = vld [vmem:[#allocation6 + $0x38] sm:$0xff]
      %v144 = vld [vmem:[#allocation6 + $0x40] sm:$0xff]
      %v145 = vld [vmem:[#allocation6 + $0x48] sm:$0xff]
      %v146 = vld [vmem:[#allocation6 + $0x50] sm:$0xff]
      %v147 = vld [vmem:[#allocation6 + $0x58] sm:$0xff]
      %v148 = vld [vmem:[#allocation6 + $0x60] sm:$0xff]
      %v149 = vld [vmem:[#allocation6 + $0x68] sm:$0xff]
      %v150 = vld [vmem:[#allocation6 + $0x70] sm:$0xff]
      %v151 = vld [vmem:[#allocation6 + $0x78] sm:$0xff]
      %v152 = vld [vmem:[#allocation6 + $0x80] sm:$0xff]
      %v153 = vld [vmem:[#allocation6 + $0x88] sm:$0xff]
      %v154 = vld [vmem:[#allocation6 + $0x90] sm:$0xff]
      %v155 = vld [vmem:[#allocation6 + $0x98] sm:$0xff]
      %v156 = vld [vmem:[#allocation6 + $0xa0] sm:$0xff]
      %v157 = vld [vmem:[#allocation6 + $0xa8] sm:$0xff]
      %v158 = vld [vmem:[#allocation6 + $0xb0] sm:$0xff]
      %v159 = vld [vmem:[#allocation6 + $0xb8] sm:$0xff]
      %v160 = vld [vmem:[#allocation6 + $0xc0] sm:$0xff]
      %v161 = vld [vmem:[#allocation6 + $0xc8] sm:$0xff]
      %v162 = vld [vmem:[#allocation6 + $0xd0] sm:$0xff]
      %v163 = vld [vmem:[#allocation6 + $0xd8] sm:$0xff]
      %v164 = vld [vmem:[#allocation6 + $0xe0] sm:$0xff]
      %v165 = vld [vmem:[#allocation6 + $0xe8] sm:$0xff]
      %v166 = vld [vmem:[#allocation6 + $0xf0] sm:$0xff]
      %v167 = vld [vmem:[#allocation6 + $0xf8] sm:$0xff]
      %v168 = vpack.c.bf16 %v127, %v127
      %v169 = vld [vmem:[#allocation10] sm:$0xff]
      %v170 = vld [vmem:[#allocation10 + $0x8] sm:$0xff]
      %v171 = vld [vmem:[#allocation10 + $0x10] sm:$0xff]
      %v172 = vld [vmem:[#allocation10 + $0x18] sm:$0xff]
      %v173 = vld [vmem:[#allocation10 + $0x20] sm:$0xff]
      %v174 = vld [vmem:[#allocation10 + $0x28] sm:$0xff]
      %v175 = vld [vmem:[#allocation10 + $0x30] sm:$0xff]
      %v176 = vld [vmem:[#allocation10 + $0x38] sm:$0xff]
      %v177 = vld [vmem:[#allocation10 + $0x40] sm:$0xff]
      %v178 = vld [vmem:[#allocation10 + $0x48] sm:$0xff]
      %v179 = vld [vmem:[#allocation10 + $0x50] sm:$0xff]
      %v180 = vld [vmem:[#allocation10 + $0x58] sm:$0xff]
      %v181 = vld [vmem:[#allocation10 + $0x60] sm:$0xff]
      %v182 = vld [vmem:[#allocation10 + $0x68] sm:$0xff]
      %v183 = vld [vmem:[#allocation10 + $0x70] sm:$0xff]
      %v184 = vld [vmem:[#allocation10 + $0x78] sm:$0xff]
      %v185 = vld [vmem:[#allocation10 + $0x80] sm:$0xff]
      %v186 = vld [vmem:[#allocation10 + $0x88] sm:$0xff]
      %v187 = vld [vmem:[#allocation10 + $0x90] sm:$0xff]
      %v188 = vld [vmem:[#allocation10 + $0x98] sm:$0xff]
      %v189 = vld [vmem:[#allocation10 + $0xa0] sm:$0xff]
      %v190 = vld [vmem:[#allocation10 + $0xa8] sm:$0xff]
      %v191 = vld [vmem:[#allocation10 + $0xb0] sm:$0xff]
      %v192 = vld [vmem:[#allocation10 + $0xb8] sm:$0xff]
      %v193 = vld [vmem:[#allocation10 + $0xc0] sm:$0xff]
      %v194 = vld [vmem:[#allocation10 + $0xc8] sm:$0xff]
      %v195 = vld [vmem:[#allocation10 + $0xd0] sm:$0xff]
      %v196 = vld [vmem:[#allocation10 + $0xd8] sm:$0xff]
      %v197 = vld [vmem:[#allocation10 + $0xe0] sm:$0xff]
      %v198 = vld [vmem:[#allocation10 + $0xe8] sm:$0xff]
      %v199 = vld [vmem:[#allocation10 + $0xf0] sm:$0xff]
      %v200 = vld [vmem:[#allocation10 + $0xf8] sm:$0xff]
      %v233 = vunpack.c.l.b16 %v169
      %v234 = vunpack.c.h.b16 %v169
      %v235 = vunpack.c.l.b16 %v170
      %v236 = vunpack.c.h.b16 %v170
      %v237 = vunpack.c.l.b16 %v171
      %v238 = vunpack.c.h.b16 %v171
      %v239 = vunpack.c.l.b16 %v172
      %v240 = vunpack.c.h.b16 %v172
      %v241 = vunpack.c.l.b16 %v173
      %v242 = vunpack.c.h.b16 %v173
      %v243 = vunpack.c.l.b16 %v174
      %v244 = vunpack.c.h.b16 %v174
      %v245 = vunpack.c.l.b16 %v175
      %v246 = vunpack.c.h.b16 %v175
      %v247 = vunpack.c.l.b16 %v176
      %v248 = vunpack.c.h.b16 %v176
      %v249 = vunpack.c.l.b16 %v177
      %v250 = vunpack.c.h.b16 %v177
      %v251 = vunpack.c.l.b16 %v178
      %v252 = vunpack.c.h.b16 %v178
      %v253 = vunpack.c.l.b16 %v179
      %v254 = vunpack.c.h.b16 %v179
      %v255 = vunpack.c.l.b16 %v180
      %v256 = vunpack.c.h.b16 %v180
      %v257 = vunpack.c.l.b16 %v181
      %v258 = vunpack.c.h.b16 %v181
      %v259 = vunpack.c.l.b16 %v182
      %v260 = vunpack.c.h.b16 %v182
      %v261 = vunpack.c.l.b16 %v183
      %v262 = vunpack.c.h.b16 %v183
      %v263 = vunpack.c.l.b16 %v184
      %v264 = vunpack.c.h.b16 %v184
      %v265 = vunpack.c.l.b16 %v185
      %v266 = vunpack.c.h.b16 %v185
      %v267 = vunpack.c.l.b16 %v186
      %v268 = vunpack.c.h.b16 %v186
      %v269 = vunpack.c.l.b16 %v187
      %v270 = vunpack.c.h.b16 %v187
      %v271 = vunpack.c.l.b16 %v188
      %v272 = vunpack.c.h.b16 %v188
      %v273 = vunpack.c.l.b16 %v189
      %v274 = vunpack.c.h.b16 %v189
      %v275 = vunpack.c.l.b16 %v190
      %v276 = vunpack.c.h.b16 %v190
      %v277 = vunpack.c.l.b16 %v191
      %v278 = vunpack.c.h.b16 %v191
      %v279 = vunpack.c.l.b16 %v192
      %v280 = vunpack.c.h.b16 %v192
      %v281 = vunpack.c.l.b16 %v193
      %v282 = vunpack.c.h.b16 %v193
      %v283 = vunpack.c.l.b16 %v194
      %v284 = vunpack.c.h.b16 %v194
      %v285 = vunpack.c.l.b16 %v195
      %v286 = vunpack.c.h.b16 %v195
      %v287 = vunpack.c.l.b16 %v196
      %v288 = vunpack.c.h.b16 %v196
      %v289 = vunpack.c.l.b16 %v197
      %v290 = vunpack.c.h.b16 %v197
      %v291 = vunpack.c.l.b16 %v198
      %v292 = vunpack.c.h.b16 %v198
      %v293 = vunpack.c.l.b16 %v199
      %v294 = vunpack.c.h.b16 %v199
      %v295 = vunpack.c.l.b16 %v200
      %v296 = vunpack.c.h.b16 %v200
      %v297 = vpack.c.b16 %v237, %v233
      %v298 = vpack.c.b16 %v238, %v234
      %v299 = vpack.c.b16 %v239, %v235
      %v300 = vpack.c.b16 %v240, %v236
      %v301 = vpack.c.b16 %v245, %v241
      %v302 = vpack.c.b16 %v246, %v242
      %v303 = vpack.c.b16 %v247, %v243
      %v304 = vpack.c.b16 %v248, %v244
      %v305 = vpack.c.b16 %v253, %v249
      %v306 = vpack.c.b16 %v254, %v250
      %v307 = vpack.c.b16 %v255, %v251
      %v308 = vpack.c.b16 %v256, %v252
      %v309 = vpack.c.b16 %v261, %v257
      %v310 = vpack.c.b16 %v262, %v258
      %v311 = vpack.c.b16 %v263, %v259
      %v312 = vpack.c.b16 %v264, %v260
      %v313 = vpack.c.b16 %v269, %v265
      %v314 = vpack.c.b16 %v270, %v266
      %v315 = vpack.c.b16 %v271, %v267
      %v316 = vpack.c.b16 %v272, %v268
      %v317 = vpack.c.b16 %v277, %v273
      %v318 = vpack.c.b16 %v278, %v274
      %v319 = vpack.c.b16 %v279, %v275
      %v320 = vpack.c.b16 %v280, %v276
      %v321 = vpack.c.b16 %v285, %v281
      %v322 = vpack.c.b16 %v286, %v282
      %v323 = vpack.c.b16 %v287, %v283
      %v324 = vpack.c.b16 %v288, %v284
      %v325 = vpack.c.b16 %v293, %v289
      %v326 = vpack.c.b16 %v294, %v290
      %v327 = vpack.c.b16 %v295, %v291
      %v328 = vpack.c.b16 %v296, %v292
      %361 = vmatprep.subr.bf16.mxu0 %v326
      %362 = vmatpush1.bf16.msra.mxu0 %v325
      %363 = vmatprep.subr.bf16.mxu0 %v322
      %364 = vmatpush1.bf16.msra.mxu0 %v321
      %365 = vmatprep.subr.bf16.mxu0 %v318
      %366 = vmatpush1.bf16.msra.mxu0 %v317
      %367 = vmatprep.subr.bf16.mxu0 %v314
      %368 = vmatpush1.bf16.msra.mxu0 %v313
      %369 = vmatprep.subr.bf16.mxu0 %v310
      %370 = vmatpush1.bf16.msra.mxu0 %v309
      %371 = vmatprep.subr.bf16.mxu0 %v306
      %372 = vmatpush1.bf16.msra.mxu0 %v305
      %373 = vmatprep.subr.bf16.mxu0 %v302
      %374 = vmatpush1.bf16.msra.mxu0 %v301
      %375 = vmatprep.subr.bf16.mxu0 %v298
      %376 = vmatpush1.bf16.msra.mxu0 %v297
      %377 = vmatprep.subr.bf16.mxu0 0
      %378 = vmatpush2.bf16.msra.mxu0 0
      %379 = vmatprep.subr.bf16.mxu0 0
      %380 = vmatpush2.bf16.msra.mxu0 0
      %381 = vmatprep.subr.bf16.mxu0 0
      %382 = vmatpush2.bf16.msra.mxu0 0
      %383 = vmatprep.subr.bf16.mxu0 0
      %384 = vmatpush2.bf16.msra.mxu0 0
      %385 = vmatprep.subr.bf16.mxu0 0
      %386 = vmatpush2.bf16.msra.mxu0 0
      %387 = vmatprep.subr.bf16.mxu0 0
      %388 = vmatpush2.bf16.msra.mxu0 0
      %389 = vmatprep.subr.bf16.mxu0 0
      %390 = vmatpush2.bf16.msra.mxu0 0
      %391 = vmatprep.subr.bf16.mxu0 0
      %392 = vmatpush2.bf16.msra.mxu0 0
      %393 = vmatprep.mubr.bf16.mxu0 0
      %394 = vmatmul.mubr.bf16.gmra.mxu0 %v168
      %v395 = vpop.f32.mrf.mxu0
      %v396 = vadd.f32 0.0, %v395
      %v397 = vpop.f32.mrf.mxu0
      %v398 = vadd.f32 0.0, %v397
      %v399 = vpop.f32.mrf.mxu0
      %v400 = vpop.f32.mrf.mxu0
      %401 = vdwg.mxu0
      %402 = vmatprep.subr.bf16.mxu0 %v328
      %403 = vmatpush1.bf16.msra.mxu0 %v327
      %404 = vmatprep.subr.bf16.mxu0 %v324
      %405 = vmatpush1.bf16.msra.mxu0 %v323
      %406 = vmatprep.subr.bf16.mxu0 %v320
      %407 = vmatpush1.bf16.msra.mxu0 %v319
      %408 = vmatprep.subr.bf16.mxu0 %v316
      %409 = vmatpush1.bf16.msra.mxu0 %v315
      %410 = vmatprep.subr.bf16.mxu0 %v312
      %411 = vmatpush1.bf16.msra.mxu0 %v311
      %412 = vmatprep.subr.bf16.mxu0 %v308
      %413 = vmatpush1.bf16.msra.mxu0 %v307
      %414 = vmatprep.subr.bf16.mxu0 %v304
      %415 = vmatpush1.bf16.msra.mxu0 %v303
      %416 = vmatprep.subr.bf16.mxu0 %v300
      %417 = vmatpush1.bf16.msra.mxu0 %v299
      %418 = vmatprep.subr.bf16.mxu0 0
      %419 = vmatpush2.bf16.msra.mxu0 0
      %420 = vmatprep.subr.bf16.mxu0 0
      %421 = vmatpush2.bf16.msra.mxu0 0
      %422 = vmatprep.subr.bf16.mxu0 0
      %423 = vmatpush2.bf16.msra.mxu0 0
      %424 = vmatprep.subr.bf16.mxu0 0
      %425 = vmatpush2.bf16.msra.mxu0 0
      %426 = vmatprep.subr.bf16.mxu0 0
      %427 = vmatpush2.bf16.msra.mxu0 0
      %428 = vmatprep.subr.bf16.mxu0 0
      %429 = vmatpush2.bf16.msra.mxu0 0
      %430 = vmatprep.subr.bf16.mxu0 0
      %431 = vmatpush2.bf16.msra.mxu0 0
      %432 = vmatprep.subr.bf16.mxu0 0
      %433 = vmatpush2.bf16.msra.mxu0 0
      %434 = vmatprep.mubr.bf16.mxu0 0
      %435 = vmatmul.mubr.bf16.gmra.mxu0 %v168
      %v436 = vpop.f32.mrf.mxu0
      %v437 = vadd.f32 0.0, %v436
      %v438 = vpop.f32.mrf.mxu0
      %v439 = vadd.f32 0.0, %v438
      %v440 = vpop.f32.mrf.mxu0
      %v441 = vpop.f32.mrf.mxu0
      %442 = vdwg.mxu0
      %v475 = vunpack.c.l.b16 %v136
      %v476 = vunpack.c.h.b16 %v136
      %v477 = vunpack.c.l.b16 %v137
      %v478 = vunpack.c.h.b16 %v137
      %v479 = vunpack.c.l.b16 %v138
      %v480 = vunpack.c.h.b16 %v138
      %v481 = vunpack.c.l.b16 %v139
      %v482 = vunpack.c.h.b16 %v139
      %v483 = vunpack.c.l.b16 %v140
      %v484 = vunpack.c.h.b16 %v140
      %v485 = vunpack.c.l.b16 %v141
      %v486 = vunpack.c.h.b16 %v141
      %v487 = vunpack.c.l.b16 %v142
      %v488 = vunpack.c.h.b16 %v142
      %v489 = vunpack.c.l.b16 %v143
      %v490 = vunpack.c.h.b16 %v143
      %v491 = vunpack.c.l.b16 %v144
      %v492 = vunpack.c.h.b16 %v144
      %v493 = vunpack.c.l.b16 %v145
      %v494 = vunpack.c.h.b16 %v145
      %v495 = vunpack.c.l.b16 %v146
      %v496 = vunpack.c.h.b16 %v146
      %v497 = vunpack.c.l.b16 %v147
      %v498 = vunpack.c.h.b16 %v147
      %v499 = vunpack.c.l.b16 %v148
      %v500 = vunpack.c.h.b16 %v148
      %v501 = vunpack.c.l.b16 %v149
      %v502 = vunpack.c.h.b16 %v149
      %v503 = vunpack.c.l.b16 %v150
      %v504 = vunpack.c.h.b16 %v150
      %v505 = vunpack.c.l.b16 %v151
      %v506 = vunpack.c.h.b16 %v151
      %v507 = vunpack.c.l.b16 %v152
      %v508 = vunpack.c.h.b16 %v152
      %v509 = vunpack.c.l.b16 %v153
      %v510 = vunpack.c.h.b16 %v153
      %v511 = vunpack.c.l.b16 %v154
      %v512 = vunpack.c.h.b16 %v154
      %v513 = vunpack.c.l.b16 %v155
      %v514 = vunpack.c.h.b16 %v155
      %v515 = vunpack.c.l.b16 %v156
      %v516 = vunpack.c.h.b16 %v156
      %v517 = vunpack.c.l.b16 %v157
      %v518 = vunpack.c.h.b16 %v157
      %v519 = vunpack.c.l.b16 %v158
      %v520 = vunpack.c.h.b16 %v158
      %v521 = vunpack.c.l.b16 %v159
      %v522 = vunpack.c.h.b16 %v159
      %v523 = vunpack.c.l.b16 %v160
      %v524 = vunpack.c.h.b16 %v160
      %v525 = vunpack.c.l.b16 %v161
      %v526 = vunpack.c.h.b16 %v161
      %v527 = vunpack.c.l.b16 %v162
      %v528 = vunpack.c.h.b16 %v162
      %v529 = vunpack.c.l.b16 %v163
      %v530 = vunpack.c.h.b16 %v163
      %v531 = vunpack.c.l.b16 %v164
      %v532 = vunpack.c.h.b16 %v164
      %v533 = vunpack.c.l.b16 %v165
      %v534 = vunpack.c.h.b16 %v165
      %v535 = vunpack.c.l.b16 %v166
      %v536 = vunpack.c.h.b16 %v166
      %v537 = vunpack.c.l.b16 %v167
      %v538 = vunpack.c.h.b16 %v167
      %v539 = vpack.c.b16 %v479, %v475
      %v540 = vpack.c.b16 %v480, %v476
      %v541 = vpack.c.b16 %v481, %v477
      %v542 = vpack.c.b16 %v482, %v478
      %v543 = vpack.c.b16 %v487, %v483
      %v544 = vpack.c.b16 %v488, %v484
      %v545 = vpack.c.b16 %v489, %v485
      %v546 = vpack.c.b16 %v490, %v486
      %v547 = vpack.c.b16 %v495, %v491
      %v548 = vpack.c.b16 %v496, %v492
      %v549 = vpack.c.b16 %v497, %v493
      %v550 = vpack.c.b16 %v498, %v494
      %v551 = vpack.c.b16 %v503, %v499
      %v552 = vpack.c.b16 %v504, %v500
      %v553 = vpack.c.b16 %v505, %v501
      %v554 = vpack.c.b16 %v506, %v502
      %v555 = vpack.c.b16 %v511, %v507
      %v556 = vpack.c.b16 %v512, %v508
      %v557 = vpack.c.b16 %v513, %v509
      %v558 = vpack.c.b16 %v514, %v510
      %v559 = vpack.c.b16 %v519, %v515
      %v560 = vpack.c.b16 %v520, %v516
      %v561 = vpack.c.b16 %v521, %v517
      %v562 = vpack.c.b16 %v522, %v518
      %v563 = vpack.c.b16 %v527, %v523
      %v564 = vpack.c.b16 %v528, %v524
      %v565 = vpack.c.b16 %v529, %v525
      %v566 = vpack.c.b16 %v530, %v526
      %v567 = vpack.c.b16 %v535, %v531
      %v568 = vpack.c.b16 %v536, %v532
      %v569 = vpack.c.b16 %v537, %v533
      %v570 = vpack.c.b16 %v538, %v534
      %603 = vmatprep.subr.bf16.mxu0 %v568
      %604 = vmatpush1.bf16.msra.mxu0 %v567
      %605 = vmatprep.subr.bf16.mxu0 %v564
      %606 = vmatpush1.bf16.msra.mxu0 %v563
      %607 = vmatprep.subr.bf16.mxu0 %v560
      %608 = vmatpush1.bf16.msra.mxu0 %v559
      %609 = vmatprep.subr.bf16.mxu0 %v556
      %610 = vmatpush1.bf16.msra.mxu0 %v555
      %611 = vmatprep.subr.bf16.mxu0 %v552
      %612 = vmatpush1.bf16.msra.mxu0 %v551
      %613 = vmatprep.subr.bf16.mxu0 %v548
      %614 = vmatpush1.bf16.msra.mxu0 %v547
      %615 = vmatprep.subr.bf16.mxu0 %v544
      %616 = vmatpush1.bf16.msra.mxu0 %v543
      %617 = vmatprep.subr.bf16.mxu0 %v540
      %618 = vmatpush1.bf16.msra.mxu0 %v539
      %619 = vmatprep.subr.bf16.mxu0 0
      %620 = vmatpush2.bf16.msra.mxu0 0
      %621 = vmatprep.subr.bf16.mxu0 0
      %622 = vmatpush2.bf16.msra.mxu0 0
      %623 = vmatprep.subr.bf16.mxu0 0
      %624 = vmatpush2.bf16.msra.mxu0 0
      %625 = vmatprep.subr.bf16.mxu0 0
      %626 = vmatpush2.bf16.msra.mxu0 0
      %627 = vmatprep.subr.bf16.mxu0 0
      %628 = vmatpush2.bf16.msra.mxu0 0
      %629 = vmatprep.subr.bf16.mxu0 0
      %630 = vmatpush2.bf16.msra.mxu0 0
      %631 = vmatprep.subr.bf16.mxu0 0
      %632 = vmatpush2.bf16.msra.mxu0 0
      %633 = vmatprep.subr.bf16.mxu0 0
      %634 = vmatpush2.bf16.msra.mxu0 0
      %635 = vmatprep.mubr.bf16.mxu0 0
      %636 = vmatmul.mubr.bf16.gmra.mxu0 %v135
      %v637 = vpop.f32.mrf.mxu0
      %v638 = vadd.f32 %v396, %v637
      %v639 = vpop.f32.mrf.mxu0
      %v640 = vadd.f32 %v398, %v639
      %v641 = vpop.f32.mrf.mxu0
      %v642 = vpop.f32.mrf.mxu0
      %643 = vdwg.mxu0
      %644 = vmatprep.subr.bf16.mxu0 %v570
      %645 = vmatpush1.bf16.msra.mxu0 %v569
      %646 = vmatprep.subr.bf16.mxu0 %v566
      %647 = vmatpush1.bf16.msra.mxu0 %v565
      %648 = vmatprep.subr.bf16.mxu0 %v562
      %649 = vmatpush1.bf16.msra.mxu0 %v561
      %650 = vmatprep.subr.bf16.mxu0 %v558
      %651 = vmatpush1.bf16.msra.mxu0 %v557
      %652 = vmatprep.subr.bf16.mxu0 %v554
      %653 = vmatpush1.bf16.msra.mxu0 %v553
      %654 = vmatprep.subr.bf16.mxu0 %v550
      %655 = vmatpush1.bf16.msra.mxu0 %v549
      %656 = vmatprep.subr.bf16.mxu0 %v546
      %657 = vmatpush1.bf16.msra.mxu0 %v545
      %658 = vmatprep.subr.bf16.mxu0 %v542
      %659 = vmatpush1.bf16.msra.mxu0 %v541
      %660 = vmatprep.subr.bf16.mxu0 0
      %661 = vmatpush2.bf16.msra.mxu0 0
      %662 = vmatprep.subr.bf16.mxu0 0
      %663 = vmatpush2.bf16.msra.mxu0 0
      %664 = vmatprep.subr.bf16.mxu0 0
      %665 = vmatpush2.bf16.msra.mxu0 0
      %666 = vmatprep.subr.bf16.mxu0 0
      %667 = vmatpush2.bf16.msra.mxu0 0
      %668 = vmatprep.subr.bf16.mxu0 0
      %669 = vmatpush2.bf16.msra.mxu0 0
      %670 = vmatprep.subr.bf16.mxu0 0
      %671 = vmatpush2.bf16.msra.mxu0 0
      %672 = vmatprep.subr.bf16.mxu0 0
      %673 = vmatpush2.bf16.msra.mxu0 0
      %674 = vmatprep.subr.bf16.mxu0 0
      %675 = vmatpush2.bf16.msra.mxu0 0
      %676 = vmatprep.mubr.bf16.mxu0 0
      %677 = vmatmul.mubr.bf16.gmra.mxu0 %v135
      %v678 = vpop.f32.mrf.mxu0
      %v679 = vadd.f32 %v437, %v678
      %v680 = vpop.f32.mrf.mxu0
      %v681 = vadd.f32 %v439, %v680
      %v682 = vpop.f32.mrf.mxu0
      %v683 = vpop.f32.mrf.mxu0
      %684 = vdwg.mxu0
      %v686 = vlaneseq
      %v687 = vshrl.u32 %v686, 7
      %v688 = vsub.s32 0, %v687
      %v689 = vrot.slane %v115, %v688
      %v690 = vlaneseq
      %v691 = vshrl.u32 %v690, 7
      %v692 = vsub.s32 1, %v691
      %v693 = vrot.slane %v115, %v692
      %v694 = vlaneseq
      %v695 = vshrl.u32 %v694, 7
      %v696 = vsub.s32 2, %v695
      %v697 = vrot.slane %v115, %v696
      %v698 = vlaneseq
      %v699 = vshrl.u32 %v698, 7
      %v700 = vsub.s32 3, %v699
      %v701 = vrot.slane %v115, %v700
      %v706 = vadd.f32 %v638, %v689
      %v707 = vadd.f32 %v640, %v693
      %v708 = vadd.f32 %v679, %v697
      %v709 = vadd.f32 %v681, %v701
      %v710 = vxor.u32 %v706, 2147483648
      %v711 = vmul.f32 %v710, 1.442695
      %v712 = vpow.pop %v711
      %v713 = vadd.f32 %v712, 1.0
      %v714 = vrcp.pop %v713
      %v715 = vmul.f32 1.0, %v714
      %v716 = vxor.u32 %v707, 2147483648
      %v717 = vmul.f32 %v716, 1.442695
      %v718 = vpow.pop %v717
      %v719 = vadd.f32 %v718, 1.0
      %v720 = vrcp.pop %v719
      %v721 = vmul.f32 1.0, %v720
      %v722 = vtanh.pop %v708
      %v723 = vxor.u32 %v709, 2147483648
      %v724 = vmul.f32 %v723, 1.442695
      %v725 = vpow.pop %v724
      %v726 = vadd.f32 %v725, 1.0
      %v727 = vrcp.pop %v726
      %v728 = vmul.f32 1.0, %v727
      %v729 = vmul.f32 %v721, %v128
      %v730 = vmul.f32 %v715, %v722
      %v731 = vadd.f32 %v729, %v730
      %v732 = vtanh.pop %v731
      %v733 = vmul.f32 %v728, %v732
      %s734 = smul.addr %s132, 4
      %s735 = scalar_lea.vmem %s103, %s734
      %v736 = vld [vmem:[%s735] sm:$0xf]
      %v737 = vld [vmem:[#allocation8] sm:$0xff]
      %v738 = vld [vmem:[#allocation8 + $0x8] sm:$0xff]
      %v739 = vld [vmem:[#allocation8 + $0x10] sm:$0xff]
      %v740 = vld [vmem:[#allocation8 + $0x18] sm:$0xff]
      %v741 = vld [vmem:[#allocation8 + $0x20] sm:$0xff]
      %v742 = vld [vmem:[#allocation8 + $0x28] sm:$0xff]
      %v743 = vld [vmem:[#allocation8 + $0x30] sm:$0xff]
      %v744 = vld [vmem:[#allocation8 + $0x38] sm:$0xff]
      %v745 = vld [vmem:[#allocation8 + $0x40] sm:$0xff]
      %v746 = vld [vmem:[#allocation8 + $0x48] sm:$0xff]
      %v747 = vld [vmem:[#allocation8 + $0x50] sm:$0xff]
      %v748 = vld [vmem:[#allocation8 + $0x58] sm:$0xff]
      %v749 = vld [vmem:[#allocation8 + $0x60] sm:$0xff]
      %v750 = vld [vmem:[#allocation8 + $0x68] sm:$0xff]
      %v751 = vld [vmem:[#allocation8 + $0x70] sm:$0xff]
      %v752 = vld [vmem:[#allocation8 + $0x78] sm:$0xff]
      %v753 = vld [vmem:[#allocation8 + $0x80] sm:$0xff]
      %v754 = vld [vmem:[#allocation8 + $0x88] sm:$0xff]
      %v755 = vld [vmem:[#allocation8 + $0x90] sm:$0xff]
      %v756 = vld [vmem:[#allocation8 + $0x98] sm:$0xff]
      %v757 = vld [vmem:[#allocation8 + $0xa0] sm:$0xff]
      %v758 = vld [vmem:[#allocation8 + $0xa8] sm:$0xff]
      %v759 = vld [vmem:[#allocation8 + $0xb0] sm:$0xff]
      %v760 = vld [vmem:[#allocation8 + $0xb8] sm:$0xff]
      %v761 = vld [vmem:[#allocation8 + $0xc0] sm:$0xff]
      %v762 = vld [vmem:[#allocation8 + $0xc8] sm:$0xff]
      %v763 = vld [vmem:[#allocation8 + $0xd0] sm:$0xff]
      %v764 = vld [vmem:[#allocation8 + $0xd8] sm:$0xff]
      %v765 = vld [vmem:[#allocation8 + $0xe0] sm:$0xff]
      %v766 = vld [vmem:[#allocation8 + $0xe8] sm:$0xff]
      %v767 = vld [vmem:[#allocation8 + $0xf0] sm:$0xff]
      %v768 = vld [vmem:[#allocation8 + $0xf8] sm:$0xff]
      %v769 = vpack.c.bf16 %v129, %v129
      %v770 = vld [vmem:[#allocation11] sm:$0xff]
      %v771 = vld [vmem:[#allocation11 + $0x8] sm:$0xff]
      %v772 = vld [vmem:[#allocation11 + $0x10] sm:$0xff]
      %v773 = vld [vmem:[#allocation11 + $0x18] sm:$0xff]
      %v774 = vld [vmem:[#allocation11 + $0x20] sm:$0xff]
      %v775 = vld [vmem:[#allocation11 + $0x28] sm:$0xff]
      %v776 = vld [vmem:[#allocation11 + $0x30] sm:$0xff]
      %v777 = vld [vmem:[#allocation11 + $0x38] sm:$0xff]
      %v778 = vld [vmem:[#allocation11 + $0x40] sm:$0xff]
      %v779 = vld [vmem:[#allocation11 + $0x48] sm:$0xff]
      %v780 = vld [vmem:[#allocation11 + $0x50] sm:$0xff]
      %v781 = vld [vmem:[#allocation11 + $0x58] sm:$0xff]
      %v782 = vld [vmem:[#allocation11 + $0x60] sm:$0xff]
      %v783 = vld [vmem:[#allocation11 + $0x68] sm:$0xff]
      %v784 = vld [vmem:[#allocation11 + $0x70] sm:$0xff]
      %v785 = vld [vmem:[#allocation11 + $0x78] sm:$0xff]
      %v786 = vld [vmem:[#allocation11 + $0x80] sm:$0xff]
      %v787 = vld [vmem:[#allocation11 + $0x88] sm:$0xff]
      %v788 = vld [vmem:[#allocation11 + $0x90] sm:$0xff]
      %v789 = vld [vmem:[#allocation11 + $0x98] sm:$0xff]
      %v790 = vld [vmem:[#allocation11 + $0xa0] sm:$0xff]
      %v791 = vld [vmem:[#allocation11 + $0xa8] sm:$0xff]
      %v792 = vld [vmem:[#allocation11 + $0xb0] sm:$0xff]
      %v793 = vld [vmem:[#allocation11 + $0xb8] sm:$0xff]
      %v794 = vld [vmem:[#allocation11 + $0xc0] sm:$0xff]
      %v795 = vld [vmem:[#allocation11 + $0xc8] sm:$0xff]
      %v796 = vld [vmem:[#allocation11 + $0xd0] sm:$0xff]
      %v797 = vld [vmem:[#allocation11 + $0xd8] sm:$0xff]
      %v798 = vld [vmem:[#allocation11 + $0xe0] sm:$0xff]
      %v799 = vld [vmem:[#allocation11 + $0xe8] sm:$0xff]
      %v800 = vld [vmem:[#allocation11 + $0xf0] sm:$0xff]
      %v801 = vld [vmem:[#allocation11 + $0xf8] sm:$0xff]
      %v834 = vunpack.c.l.b16 %v770
      %v835 = vunpack.c.h.b16 %v770
      %v836 = vunpack.c.l.b16 %v771
      %v837 = vunpack.c.h.b16 %v771
      %v838 = vunpack.c.l.b16 %v772
      %v839 = vunpack.c.h.b16 %v772
      %v840 = vunpack.c.l.b16 %v773
      %v841 = vunpack.c.h.b16 %v773
      %v842 = vunpack.c.l.b16 %v774
      %v843 = vunpack.c.h.b16 %v774
      %v844 = vunpack.c.l.b16 %v775
      %v845 = vunpack.c.h.b16 %v775
      %v846 = vunpack.c.l.b16 %v776
      %v847 = vunpack.c.h.b16 %v776
      %v848 = vunpack.c.l.b16 %v777
      %v849 = vunpack.c.h.b16 %v777
      %v850 = vunpack.c.l.b16 %v778
      %v851 = vunpack.c.h.b16 %v778
      %v852 = vunpack.c.l.b16 %v779
      %v853 = vunpack.c.h.b16 %v779
      %v854 = vunpack.c.l.b16 %v780
      %v855 = vunpack.c.h.b16 %v780
      %v856 = vunpack.c.l.b16 %v781
      %v857 = vunpack.c.h.b16 %v781
      %v858 = vunpack.c.l.b16 %v782
      %v859 = vunpack.c.h.b16 %v782
      %v860 = vunpack.c.l.b16 %v783
      %v861 = vunpack.c.h.b16 %v783
      %v862 = vunpack.c.l.b16 %v784
      %v863 = vunpack.c.h.b16 %v784
      %v864 = vunpack.c.l.b16 %v785
      %v865 = vunpack.c.h.b16 %v785
      %v866 = vunpack.c.l.b16 %v786
      %v867 = vunpack.c.h.b16 %v786
      %v868 = vunpack.c.l.b16 %v787
      %v869 = vunpack.c.h.b16 %v787
      %v870 = vunpack.c.l.b16 %v788
      %v871 = vunpack.c.h.b16 %v788
      %v872 = vunpack.c.l.b16 %v789
      %v873 = vunpack.c.h.b16 %v789
      %v874 = vunpack.c.l.b16 %v790
      %v875 = vunpack.c.h.b16 %v790
      %v876 = vunpack.c.l.b16 %v791
      %v877 = vunpack.c.h.b16 %v791
      %v878 = vunpack.c.l.b16 %v792
      %v879 = vunpack.c.h.b16 %v792
      %v880 = vunpack.c.l.b16 %v793
      %v881 = vunpack.c.h.b16 %v793
      %v882 = vunpack.c.l.b16 %v794
      %v883 = vunpack.c.h.b16 %v794
      %v884 = vunpack.c.l.b16 %v795
      %v885 = vunpack.c.h.b16 %v795
      %v886 = vunpack.c.l.b16 %v796
      %v887 = vunpack.c.h.b16 %v796
      %v888 = vunpack.c.l.b16 %v797
      %v889 = vunpack.c.h.b16 %v797
      %v890 = vunpack.c.l.b16 %v798
      %v891 = vunpack.c.h.b16 %v798
      %v892 = vunpack.c.l.b16 %v799
      %v893 = vunpack.c.h.b16 %v799
      %v894 = vunpack.c.l.b16 %v800
      %v895 = vunpack.c.h.b16 %v800
      %v896 = vunpack.c.l.b16 %v801
      %v897 = vunpack.c.h.b16 %v801
      %v898 = vpack.c.b16 %v838, %v834
      %v899 = vpack.c.b16 %v839, %v835
      %v900 = vpack.c.b16 %v840, %v836
      %v901 = vpack.c.b16 %v841, %v837
      %v902 = vpack.c.b16 %v846, %v842
      %v903 = vpack.c.b16 %v847, %v843
      %v904 = vpack.c.b16 %v848, %v844
      %v905 = vpack.c.b16 %v849, %v845
      %v906 = vpack.c.b16 %v854, %v850
      %v907 = vpack.c.b16 %v855, %v851
      %v908 = vpack.c.b16 %v856, %v852
      %v909 = vpack.c.b16 %v857, %v853
      %v910 = vpack.c.b16 %v862, %v858
      %v911 = vpack.c.b16 %v863, %v859
      %v912 = vpack.c.b16 %v864, %v860
      %v913 = vpack.c.b16 %v865, %v861
      %v914 = vpack.c.b16 %v870, %v866
      %v915 = vpack.c.b16 %v871, %v867
      %v916 = vpack.c.b16 %v872, %v868
      %v917 = vpack.c.b16 %v873, %v869
      %v918 = vpack.c.b16 %v878, %v874
      %v919 = vpack.c.b16 %v879, %v875
      %v920 = vpack.c.b16 %v880, %v876
      %v921 = vpack.c.b16 %v881, %v877
      %v922 = vpack.c.b16 %v886, %v882
      %v923 = vpack.c.b16 %v887, %v883
      %v924 = vpack.c.b16 %v888, %v884
      %v925 = vpack.c.b16 %v889, %v885
      %v926 = vpack.c.b16 %v894, %v890
      %v927 = vpack.c.b16 %v895, %v891
      %v928 = vpack.c.b16 %v896, %v892
      %v929 = vpack.c.b16 %v897, %v893
      %962 = vmatprep.subr.bf16.mxu0 %v927
      %963 = vmatpush1.bf16.msra.mxu0 %v926
      %964 = vmatprep.subr.bf16.mxu0 %v923
      %965 = vmatpush1.bf16.msra.mxu0 %v922
      %966 = vmatprep.subr.bf16.mxu0 %v919
      %967 = vmatpush1.bf16.msra.mxu0 %v918
      %968 = vmatprep.subr.bf16.mxu0 %v915
      %969 = vmatpush1.bf16.msra.mxu0 %v914
      %970 = vmatprep.subr.bf16.mxu0 %v911
      %971 = vmatpush1.bf16.msra.mxu0 %v910
      %972 = vmatprep.subr.bf16.mxu0 %v907
      %973 = vmatpush1.bf16.msra.mxu0 %v906
      %974 = vmatprep.subr.bf16.mxu0 %v903
      %975 = vmatpush1.bf16.msra.mxu0 %v902
      %976 = vmatprep.subr.bf16.mxu0 %v899
      %977 = vmatpush1.bf16.msra.mxu0 %v898
      %978 = vmatprep.subr.bf16.mxu0 0
      %979 = vmatpush2.bf16.msra.mxu0 0
      %980 = vmatprep.subr.bf16.mxu0 0
      %981 = vmatpush2.bf16.msra.mxu0 0
      %982 = vmatprep.subr.bf16.mxu0 0
      %983 = vmatpush2.bf16.msra.mxu0 0
      %984 = vmatprep.subr.bf16.mxu0 0
      %985 = vmatpush2.bf16.msra.mxu0 0
      %986 = vmatprep.subr.bf16.mxu0 0
      %987 = vmatpush2.bf16.msra.mxu0 0
      %988 = vmatprep.subr.bf16.mxu0 0
      %989 = vmatpush2.bf16.msra.mxu0 0
      %990 = vmatprep.subr.bf16.mxu0 0
      %991 = vmatpush2.bf16.msra.mxu0 0
      %992 = vmatprep.subr.bf16.mxu0 0
      %993 = vmatpush2.bf16.msra.mxu0 0
      %994 = vmatprep.mubr.bf16.mxu0 0
      %995 = vmatmul.mubr.bf16.gmra.mxu0 %v769
      %v996 = vpop.f32.mrf.mxu0
      %v997 = vadd.f32 0.0, %v996
      %v998 = vpop.f32.mrf.mxu0
      %v999 = vadd.f32 0.0, %v998
      %v1000 = vpop.f32.mrf.mxu0
      %v1001 = vpop.f32.mrf.mxu0
      %1002 = vdwg.mxu0
      %1003 = vmatprep.subr.bf16.mxu0 %v929
      %1004 = vmatpush1.bf16.msra.mxu0 %v928
      %1005 = vmatprep.subr.bf16.mxu0 %v925
      %1006 = vmatpush1.bf16.msra.mxu0 %v924
      %1007 = vmatprep.subr.bf16.mxu0 %v921
      %1008 = vmatpush1.bf16.msra.mxu0 %v920
      %1009 = vmatprep.subr.bf16.mxu0 %v917
      %1010 = vmatpush1.bf16.msra.mxu0 %v916
      %1011 = vmatprep.subr.bf16.mxu0 %v913
      %1012 = vmatpush1.bf16.msra.mxu0 %v912
      %1013 = vmatprep.subr.bf16.mxu0 %v909
      %1014 = vmatpush1.bf16.msra.mxu0 %v908
      %1015 = vmatprep.subr.bf16.mxu0 %v905
      %1016 = vmatpush1.bf16.msra.mxu0 %v904
      %1017 = vmatprep.subr.bf16.mxu0 %v901
      %1018 = vmatpush1.bf16.msra.mxu0 %v900
      %1019 = vmatprep.subr.bf16.mxu0 0
      %1020 = vmatpush2.bf16.msra.mxu0 0
      %1021 = vmatprep.subr.bf16.mxu0 0
      %1022 = vmatpush2.bf16.msra.mxu0 0
      %1023 = vmatprep.subr.bf16.mxu0 0
      %1024 = vmatpush2.bf16.msra.mxu0 0
      %1025 = vmatprep.subr.bf16.mxu0 0
      %1026 = vmatpush2.bf16.msra.mxu0 0
      %1027 = vmatprep.subr.bf16.mxu0 0
      %1028 = vmatpush2.bf16.msra.mxu0 0
      %1029 = vmatprep.subr.bf16.mxu0 0
      %1030 = vmatpush2.bf16.msra.mxu0 0
      %1031 = vmatprep.subr.bf16.mxu0 0
      %1032 = vmatpush2.bf16.msra.mxu0 0
      %1033 = vmatprep.subr.bf16.mxu0 0
      %1034 = vmatpush2.bf16.msra.mxu0 0
      %1035 = vmatprep.mubr.bf16.mxu0 0
      %1036 = vmatmul.mubr.bf16.gmra.mxu0 %v769
      %v1037 = vpop.f32.mrf.mxu0
      %v1038 = vadd.f32 0.0, %v1037
      %v1039 = vpop.f32.mrf.mxu0
      %v1040 = vadd.f32 0.0, %v1039
      %v1041 = vpop.f32.mrf.mxu0
      %v1042 = vpop.f32.mrf.mxu0
      %1043 = vdwg.mxu0
      %v1076 = vunpack.c.l.b16 %v737
      %v1077 = vunpack.c.h.b16 %v737
      %v1078 = vunpack.c.l.b16 %v738
      %v1079 = vunpack.c.h.b16 %v738
      %v1080 = vunpack.c.l.b16 %v739
      %v1081 = vunpack.c.h.b16 %v739
      %v1082 = vunpack.c.l.b16 %v740
      %v1083 = vunpack.c.h.b16 %v740
      %v1084 = vunpack.c.l.b16 %v741
      %v1085 = vunpack.c.h.b16 %v741
      %v1086 = vunpack.c.l.b16 %v742
      %v1087 = vunpack.c.h.b16 %v742
      %v1088 = vunpack.c.l.b16 %v743
      %v1089 = vunpack.c.h.b16 %v743
      %v1090 = vunpack.c.l.b16 %v744
      %v1091 = vunpack.c.h.b16 %v744
      %v1092 = vunpack.c.l.b16 %v745
      %v1093 = vunpack.c.h.b16 %v745
      %v1094 = vunpack.c.l.b16 %v746
      %v1095 = vunpack.c.h.b16 %v746
      %v1096 = vunpack.c.l.b16 %v747
      %v1097 = vunpack.c.h.b16 %v747
      %v1098 = vunpack.c.l.b16 %v748
      %v1099 = vunpack.c.h.b16 %v748
      %v1100 = vunpack.c.l.b16 %v749
      %v1101 = vunpack.c.h.b16 %v749
      %v1102 = vunpack.c.l.b16 %v750
      %v1103 = vunpack.c.h.b16 %v750
      %v1104 = vunpack.c.l.b16 %v751
      %v1105 = vunpack.c.h.b16 %v751
      %v1106 = vunpack.c.l.b16 %v752
      %v1107 = vunpack.c.h.b16 %v752
      %v1108 = vunpack.c.l.b16 %v753
      %v1109 = vunpack.c.h.b16 %v753
      %v1110 = vunpack.c.l.b16 %v754
      %v1111 = vunpack.c.h.b16 %v754
      %v1112 = vunpack.c.l.b16 %v755
      %v1113 = vunpack.c.h.b16 %v755
      %v1114 = vunpack.c.l.b16 %v756
      %v1115 = vunpack.c.h.b16 %v756
      %v1116 = vunpack.c.l.b16 %v757
      %v1117 = vunpack.c.h.b16 %v757
      %v1118 = vunpack.c.l.b16 %v758
      %v1119 = vunpack.c.h.b16 %v758
      %v1120 = vunpack.c.l.b16 %v759
      %v1121 = vunpack.c.h.b16 %v759
      %v1122 = vunpack.c.l.b16 %v760
      %v1123 = vunpack.c.h.b16 %v760
      %v1124 = vunpack.c.l.b16 %v761
      %v1125 = vunpack.c.h.b16 %v761
      %v1126 = vunpack.c.l.b16 %v762
      %v1127 = vunpack.c.h.b16 %v762
      %v1128 = vunpack.c.l.b16 %v763
      %v1129 = vunpack.c.h.b16 %v763
      %v1130 = vunpack.c.l.b16 %v764
      %v1131 = vunpack.c.h.b16 %v764
      %v1132 = vunpack.c.l.b16 %v765
      %v1133 = vunpack.c.h.b16 %v765
      %v1134 = vunpack.c.l.b16 %v766
      %v1135 = vunpack.c.h.b16 %v766
      %v1136 = vunpack.c.l.b16 %v767
      %v1137 = vunpack.c.h.b16 %v767
      %v1138 = vunpack.c.l.b16 %v768
      %v1139 = vunpack.c.h.b16 %v768
      %v1140 = vpack.c.b16 %v1080, %v1076
      %v1141 = vpack.c.b16 %v1081, %v1077
      %v1142 = vpack.c.b16 %v1082, %v1078
      %v1143 = vpack.c.b16 %v1083, %v1079
      %v1144 = vpack.c.b16 %v1088, %v1084
      %v1145 = vpack.c.b16 %v1089, %v1085
      %v1146 = vpack.c.b16 %v1090, %v1086
      %v1147 = vpack.c.b16 %v1091, %v1087
      %v1148 = vpack.c.b16 %v1096, %v1092
      %v1149 = vpack.c.b16 %v1097, %v1093
      %v1150 = vpack.c.b16 %v1098, %v1094
      %v1151 = vpack.c.b16 %v1099, %v1095
      %v1152 = vpack.c.b16 %v1104, %v1100
      %v1153 = vpack.c.b16 %v1105, %v1101
      %v1154 = vpack.c.b16 %v1106, %v1102
      %v1155 = vpack.c.b16 %v1107, %v1103
      %v1156 = vpack.c.b16 %v1112, %v1108
      %v1157 = vpack.c.b16 %v1113, %v1109
      %v1158 = vpack.c.b16 %v1114, %v1110
      %v1159 = vpack.c.b16 %v1115, %v1111
      %v1160 = vpack.c.b16 %v1120, %v1116
      %v1161 = vpack.c.b16 %v1121, %v1117
      %v1162 = vpack.c.b16 %v1122, %v1118
      %v1163 = vpack.c.b16 %v1123, %v1119
      %v1164 = vpack.c.b16 %v1128, %v1124
      %v1165 = vpack.c.b16 %v1129, %v1125
      %v1166 = vpack.c.b16 %v1130, %v1126
      %v1167 = vpack.c.b16 %v1131, %v1127
      %v1168 = vpack.c.b16 %v1136, %v1132
      %v1169 = vpack.c.b16 %v1137, %v1133
      %v1170 = vpack.c.b16 %v1138, %v1134
      %v1171 = vpack.c.b16 %v1139, %v1135
      %1204 = vmatprep.subr.bf16.mxu0 %v1169
      %1205 = vmatpush1.bf16.msra.mxu0 %v1168
      %1206 = vmatprep.subr.bf16.mxu0 %v1165
      %1207 = vmatpush1.bf16.msra.mxu0 %v1164
      %1208 = vmatprep.subr.bf16.mxu0 %v1161
      %1209 = vmatpush1.bf16.msra.mxu0 %v1160
      %1210 = vmatprep.subr.bf16.mxu0 %v1157
      %1211 = vmatpush1.bf16.msra.mxu0 %v1156
      %1212 = vmatprep.subr.bf16.mxu0 %v1153
      %1213 = vmatpush1.bf16.msra.mxu0 %v1152
      %1214 = vmatprep.subr.bf16.mxu0 %v1149
      %1215 = vmatpush1.bf16.msra.mxu0 %v1148
      %1216 = vmatprep.subr.bf16.mxu0 %v1145
      %1217 = vmatpush1.bf16.msra.mxu0 %v1144
      %1218 = vmatprep.subr.bf16.mxu0 %v1141
      %1219 = vmatpush1.bf16.msra.mxu0 %v1140
      %1220 = vmatprep.subr.bf16.mxu0 0
      %1221 = vmatpush2.bf16.msra.mxu0 0
      %1222 = vmatprep.subr.bf16.mxu0 0
      %1223 = vmatpush2.bf16.msra.mxu0 0
      %1224 = vmatprep.subr.bf16.mxu0 0
      %1225 = vmatpush2.bf16.msra.mxu0 0
      %1226 = vmatprep.subr.bf16.mxu0 0
      %1227 = vmatpush2.bf16.msra.mxu0 0
      %1228 = vmatprep.subr.bf16.mxu0 0
      %1229 = vmatpush2.bf16.msra.mxu0 0
      %1230 = vmatprep.subr.bf16.mxu0 0
      %1231 = vmatpush2.bf16.msra.mxu0 0
      %1232 = vmatprep.subr.bf16.mxu0 0
      %1233 = vmatpush2.bf16.msra.mxu0 0
      %1234 = vmatprep.subr.bf16.mxu0 0
      %1235 = vmatpush2.bf16.msra.mxu0 0
      %1236 = vmatprep.mubr.bf16.mxu0 0
      %1237 = vmatmul.mubr.bf16.gmra.mxu0 %v736
      %v1238 = vpop.f32.mrf.mxu0
      %v1239 = vadd.f32 %v997, %v1238
      %v1240 = vpop.f32.mrf.mxu0
      %v1241 = vadd.f32 %v999, %v1240
      %v1242 = vpop.f32.mrf.mxu0
      %v1243 = vpop.f32.mrf.mxu0
      %1244 = vdwg.mxu0
      %1245 = vmatprep.subr.bf16.mxu0 %v1171
      %1246 = vmatpush1.bf16.msra.mxu0 %v1170
      %1247 = vmatprep.subr.bf16.mxu0 %v1167
      %1248 = vmatpush1.bf16.msra.mxu0 %v1166
      %1249 = vmatprep.subr.bf16.mxu0 %v1163
      %1250 = vmatpush1.bf16.msra.mxu0 %v1162
      %1251 = vmatprep.subr.bf16.mxu0 %v1159
      %1252 = vmatpush1.bf16.msra.mxu0 %v1158
      %1253 = vmatprep.subr.bf16.mxu0 %v1155
      %1254 = vmatpush1.bf16.msra.mxu0 %v1154
      %1255 = vmatprep.subr.bf16.mxu0 %v1151
      %1256 = vmatpush1.bf16.msra.mxu0 %v1150
      %1257 = vmatprep.subr.bf16.mxu0 %v1147
      %1258 = vmatpush1.bf16.msra.mxu0 %v1146
      %1259 = vmatprep.subr.bf16.mxu0 %v1143
      %1260 = vmatpush1.bf16.msra.mxu0 %v1142
      %1261 = vmatprep.subr.bf16.mxu0 0
      %1262 = vmatpush2.bf16.msra.mxu0 0
      %1263 = vmatprep.subr.bf16.mxu0 0
      %1264 = vmatpush2.bf16.msra.mxu0 0
      %1265 = vmatprep.subr.bf16.mxu0 0
      %1266 = vmatpush2.bf16.msra.mxu0 0
      %1267 = vmatprep.subr.bf16.mxu0 0
      %1268 = vmatpush2.bf16.msra.mxu0 0
      %1269 = vmatprep.subr.bf16.mxu0 0
      %1270 = vmatpush2.bf16.msra.mxu0 0
      %1271 = vmatprep.subr.bf16.mxu0 0
      %1272 = vmatpush2.bf16.msra.mxu0 0
      %1273 = vmatprep.subr.bf16.mxu0 0
      %1274 = vmatpush2.bf16.msra.mxu0 0
      %1275 = vmatprep.subr.bf16.mxu0 0
      %1276 = vmatpush2.bf16.msra.mxu0 0
      %1277 = vmatprep.mubr.bf16.mxu0 0
      %1278 = vmatmul.mubr.bf16.gmra.mxu0 %v736
      %v1279 = vpop.f32.mrf.mxu0
      %v1280 = vadd.f32 %v1038, %v1279
      %v1281 = vpop.f32.mrf.mxu0
      %v1282 = vadd.f32 %v1040, %v1281
      %v1283 = vpop.f32.mrf.mxu0
      %v1284 = vpop.f32.mrf.mxu0
      %1285 = vdwg.mxu0
      %v1287 = vlaneseq
      %v1288 = vshrl.u32 %v1287, 7
      %v1289 = vsub.s32 0, %v1288
      %v1290 = vrot.slane %v116, %v1289
      %v1291 = vlaneseq
      %v1292 = vshrl.u32 %v1291, 7
      %v1293 = vsub.s32 1, %v1292
      %v1294 = vrot.slane %v116, %v1293
      %v1295 = vlaneseq
      %v1296 = vshrl.u32 %v1295, 7
      %v1297 = vsub.s32 2, %v1296
      %v1298 = vrot.slane %v116, %v1297
      %v1299 = vlaneseq
      %v1300 = vshrl.u32 %v1299, 7
      %v1301 = vsub.s32 3, %v1300
      %v1302 = vrot.slane %v116, %v1301
      %v1307 = vadd.f32 %v1239, %v1290
      %v1308 = vadd.f32 %v1241, %v1294
      %v1309 = vadd.f32 %v1280, %v1298
      %v1310 = vadd.f32 %v1282, %v1302
      %v1311 = vxor.u32 %v1307, 2147483648
      %v1312 = vmul.f32 %v1311, 1.442695
      %v1313 = vpow.pop %v1312
      %v1314 = vadd.f32 %v1313, 1.0
      %v1315 = vrcp.pop %v1314
      %v1316 = vmul.f32 1.0, %v1315
      %v1317 = vxor.u32 %v1308, 2147483648
      %v1318 = vmul.f32 %v1317, 1.442695
      %v1319 = vpow.pop %v1318
      %v1320 = vadd.f32 %v1319, 1.0
      %v1321 = vrcp.pop %v1320
      %v1322 = vmul.f32 1.0, %v1321
      %v1323 = vtanh.pop %v1309
      %v1324 = vxor.u32 %v1310, 2147483648
      %v1325 = vmul.f32 %v1324, 1.442695
      %v1326 = vpow.pop %v1325
      %v1327 = vadd.f32 %v1326, 1.0
      %v1328 = vrcp.pop %v1327
      %v1329 = vmul.f32 1.0, %v1328
      %v1330 = vmul.f32 %v1322, %v130
      %v1331 = vmul.f32 %v1316, %v1323
      %v1332 = vadd.f32 %v1330, %v1331
      %v1333 = vtanh.pop %v1332
      %v1334 = vmul.f32 %v1329, %v1333
      %s1335 = sadd.s32 %s131, 1
      %s1336 = ssub.s32 6, %s131
      %s1337 = smul.addr %s1335, 4
      %s1338 = scalar_lea.vmem %s0, %s1337
      %v1339 = vld [vmem:[%s1338] sm:$0xf]
      %v1340 = vpack.c.bf16 %v733, %v733
      %1341 = vmatprep.subr.bf16.mxu0 %v326
      %1342 = vmatpush1.bf16.msra.mxu0 %v325
      %1343 = vmatprep.subr.bf16.mxu0 %v322
      %1344 = vmatpush1.bf16.msra.mxu0 %v321
      %1345 = vmatprep.subr.bf16.mxu0 %v318
      %1346 = vmatpush1.bf16.msra.mxu0 %v317
      %1347 = vmatprep.subr.bf16.mxu0 %v314
      %1348 = vmatpush1.bf16.msra.mxu0 %v313
      %1349 = vmatprep.subr.bf16.mxu0 %v310
      %1350 = vmatpush1.bf16.msra.mxu0 %v309
      %1351 = vmatprep.subr.bf16.mxu0 %v306
      %1352 = vmatpush1.bf16.msra.mxu0 %v305
      %1353 = vmatprep.subr.bf16.mxu0 %v302
      %1354 = vmatpush1.bf16.msra.mxu0 %v301
      %1355 = vmatprep.subr.bf16.mxu0 %v298
      %1356 = vmatpush1.bf16.msra.mxu0 %v297
      %1357 = vmatprep.subr.bf16.mxu0 0
      %1358 = vmatpush2.bf16.msra.mxu0 0
      %1359 = vmatprep.subr.bf16.mxu0 0
      %1360 = vmatpush2.bf16.msra.mxu0 0
      %1361 = vmatprep.subr.bf16.mxu0 0
      %1362 = vmatpush2.bf16.msra.mxu0 0
      %1363 = vmatprep.subr.bf16.mxu0 0
      %1364 = vmatpush2.bf16.msra.mxu0 0
      %1365 = vmatprep.subr.bf16.mxu0 0
      %1366 = vmatpush2.bf16.msra.mxu0 0
      %1367 = vmatprep.subr.bf16.mxu0 0
      %1368 = vmatpush2.bf16.msra.mxu0 0
      %1369 = vmatprep.subr.bf16.mxu0 0
      %1370 = vmatpush2.bf16.msra.mxu0 0
      %1371 = vmatprep.subr.bf16.mxu0 0
      %1372 = vmatpush2.bf16.msra.mxu0 0
      %1373 = vmatprep.mubr.bf16.mxu0 0
      %1374 = vmatmul.mubr.bf16.gmra.mxu0 %v1340
      %v1375 = vpop.f32.mrf.mxu0
      %v1376 = vadd.f32 0.0, %v1375
      %v1377 = vpop.f32.mrf.mxu0
      %v1378 = vadd.f32 0.0, %v1377
      %v1379 = vpop.f32.mrf.mxu0
      %v1380 = vpop.f32.mrf.mxu0
      %1381 = vdwg.mxu0
      %1382 = vmatprep.subr.bf16.mxu0 %v328
      %1383 = vmatpush1.bf16.msra.mxu0 %v327
      %1384 = vmatprep.subr.bf16.mxu0 %v324
      %1385 = vmatpush1.bf16.msra.mxu0 %v323
      %1386 = vmatprep.subr.bf16.mxu0 %v320
      %1387 = vmatpush1.bf16.msra.mxu0 %v319
      %1388 = vmatprep.subr.bf16.mxu0 %v316
      %1389 = vmatpush1.bf16.msra.mxu0 %v315
      %1390 = vmatprep.subr.bf16.mxu0 %v312
      %1391 = vmatpush1.bf16.msra.mxu0 %v311
      %1392 = vmatprep.subr.bf16.mxu0 %v308
      %1393 = vmatpush1.bf16.msra.mxu0 %v307
      %1394 = vmatprep.subr.bf16.mxu0 %v304
      %1395 = vmatpush1.bf16.msra.mxu0 %v303
      %1396 = vmatprep.subr.bf16.mxu0 %v300
      %1397 = vmatpush1.bf16.msra.mxu0 %v299
      %1398 = vmatprep.subr.bf16.mxu0 0
      %1399 = vmatpush2.bf16.msra.mxu0 0
      %1400 = vmatprep.subr.bf16.mxu0 0
      %1401 = vmatpush2.bf16.msra.mxu0 0
      %1402 = vmatprep.subr.bf16.mxu0 0
      %1403 = vmatpush2.bf16.msra.mxu0 0
      %1404 = vmatprep.subr.bf16.mxu0 0
      %1405 = vmatpush2.bf16.msra.mxu0 0
      %1406 = vmatprep.subr.bf16.mxu0 0
      %1407 = vmatpush2.bf16.msra.mxu0 0
      %1408 = vmatprep.subr.bf16.mxu0 0
      %1409 = vmatpush2.bf16.msra.mxu0 0
      %1410 = vmatprep.subr.bf16.mxu0 0
      %1411 = vmatpush2.bf16.msra.mxu0 0
      %1412 = vmatprep.subr.bf16.mxu0 0
      %1413 = vmatpush2.bf16.msra.mxu0 0
      %1414 = vmatprep.mubr.bf16.mxu0 0
      %1415 = vmatmul.mubr.bf16.gmra.mxu0 %v1340
      %v1416 = vpop.f32.mrf.mxu0
      %v1417 = vadd.f32 0.0, %v1416
      %v1418 = vpop.f32.mrf.mxu0
      %v1419 = vadd.f32 0.0, %v1418
      %v1420 = vpop.f32.mrf.mxu0
      %v1421 = vpop.f32.mrf.mxu0
      %1422 = vdwg.mxu0
      %1423 = vmatprep.subr.bf16.mxu0 %v568
      %1424 = vmatpush1.bf16.msra.mxu0 %v567
      %1425 = vmatprep.subr.bf16.mxu0 %v564
      %1426 = vmatpush1.bf16.msra.mxu0 %v563
      %1427 = vmatprep.subr.bf16.mxu0 %v560
      %1428 = vmatpush1.bf16.msra.mxu0 %v559
      %1429 = vmatprep.subr.bf16.mxu0 %v556
      %1430 = vmatpush1.bf16.msra.mxu0 %v555
      %1431 = vmatprep.subr.bf16.mxu0 %v552
      %1432 = vmatpush1.bf16.msra.mxu0 %v551
      %1433 = vmatprep.subr.bf16.mxu0 %v548
      %1434 = vmatpush1.bf16.msra.mxu0 %v547
      %1435 = vmatprep.subr.bf16.mxu0 %v544
      %1436 = vmatpush1.bf16.msra.mxu0 %v543
      %1437 = vmatprep.subr.bf16.mxu0 %v540
      %1438 = vmatpush1.bf16.msra.mxu0 %v539
      %1439 = vmatprep.subr.bf16.mxu0 0
      %1440 = vmatpush2.bf16.msra.mxu0 0
      %1441 = vmatprep.subr.bf16.mxu0 0
      %1442 = vmatpush2.bf16.msra.mxu0 0
      %1443 = vmatprep.subr.bf16.mxu0 0
      %1444 = vmatpush2.bf16.msra.mxu0 0
      %1445 = vmatprep.subr.bf16.mxu0 0
      %1446 = vmatpush2.bf16.msra.mxu0 0
      %1447 = vmatprep.subr.bf16.mxu0 0
      %1448 = vmatpush2.bf16.msra.mxu0 0
      %1449 = vmatprep.subr.bf16.mxu0 0
      %1450 = vmatpush2.bf16.msra.mxu0 0
      %1451 = vmatprep.subr.bf16.mxu0 0
      %1452 = vmatpush2.bf16.msra.mxu0 0
      %1453 = vmatprep.subr.bf16.mxu0 0
      %1454 = vmatpush2.bf16.msra.mxu0 0
      %1455 = vmatprep.mubr.bf16.mxu0 0
      %1456 = vmatmul.mubr.bf16.gmra.mxu0 %v1339
      %v1457 = vpop.f32.mrf.mxu0
      %v1458 = vadd.f32 %v1376, %v1457
      %v1459 = vpop.f32.mrf.mxu0
      %v1460 = vadd.f32 %v1378, %v1459
      %v1461 = vpop.f32.mrf.mxu0
      %v1462 = vpop.f32.mrf.mxu0
      %1463 = vdwg.mxu0
      %1464 = vmatprep.subr.bf16.mxu0 %v570
      %1465 = vmatpush1.bf16.msra.mxu0 %v569
      %1466 = vmatprep.subr.bf16.mxu0 %v566
      %1467 = vmatpush1.bf16.msra.mxu0 %v565
      %1468 = vmatprep.subr.bf16.mxu0 %v562
      %1469 = vmatpush1.bf16.msra.mxu0 %v561
      %1470 = vmatprep.subr.bf16.mxu0 %v558
      %1471 = vmatpush1.bf16.msra.mxu0 %v557
      %1472 = vmatprep.subr.bf16.mxu0 %v554
      %1473 = vmatpush1.bf16.msra.mxu0 %v553
      %1474 = vmatprep.subr.bf16.mxu0 %v550
      %1475 = vmatpush1.bf16.msra.mxu0 %v549
      %1476 = vmatprep.subr.bf16.mxu0 %v546
      %1477 = vmatpush1.bf16.msra.mxu0 %v545
      %1478 = vmatprep.subr.bf16.mxu0 %v542
      %1479 = vmatpush1.bf16.msra.mxu0 %v541
      %1480 = vmatprep.subr.bf16.mxu0 0
      %1481 = vmatpush2.bf16.msra.mxu0 0
      %1482 = vmatprep.subr.bf16.mxu0 0
      %1483 = vmatpush2.bf16.msra.mxu0 0
      %1484 = vmatprep.subr.bf16.mxu0 0
      %1485 = vmatpush2.bf16.msra.mxu0 0
      %1486 = vmatprep.subr.bf16.mxu0 0
      %1487 = vmatpush2.bf16.msra.mxu0 0
      %1488 = vmatprep.subr.bf16.mxu0 0
      %1489 = vmatpush2.bf16.msra.mxu0 0
      %1490 = vmatprep.subr.bf16.mxu0 0
      %1491 = vmatpush2.bf16.msra.mxu0 0
      %1492 = vmatprep.subr.bf16.mxu0 0
      %1493 = vmatpush2.bf16.msra.mxu0 0
      %1494 = vmatprep.subr.bf16.mxu0 0
      %1495 = vmatpush2.bf16.msra.mxu0 0
      %1496 = vmatprep.mubr.bf16.mxu0 0
      %1497 = vmatmul.mubr.bf16.gmra.mxu0 %v1339
      %v1498 = vpop.f32.mrf.mxu0
      %v1499 = vadd.f32 %v1417, %v1498
      %v1500 = vpop.f32.mrf.mxu0
      %v1501 = vadd.f32 %v1419, %v1500
      %v1502 = vpop.f32.mrf.mxu0
      %v1503 = vpop.f32.mrf.mxu0
      %1504 = vdwg.mxu0
      %v1505 = vadd.f32 %v1458, %v689
      %v1506 = vadd.f32 %v1460, %v693
      %v1507 = vadd.f32 %v1499, %v697
      %v1508 = vadd.f32 %v1501, %v701
      %v1509 = vxor.u32 %v1505, 2147483648
      %v1510 = vmul.f32 %v1509, 1.442695
      %v1511 = vpow.pop %v1510
      %v1512 = vadd.f32 %v1511, 1.0
      %v1513 = vrcp.pop %v1512
      %v1514 = vmul.f32 1.0, %v1513
      %v1515 = vxor.u32 %v1506, 2147483648
      %v1516 = vmul.f32 %v1515, 1.442695
      %v1517 = vpow.pop %v1516
      %v1518 = vadd.f32 %v1517, 1.0
      %v1519 = vrcp.pop %v1518
      %v1520 = vmul.f32 1.0, %v1519
      %v1521 = vtanh.pop %v1507
      %v1522 = vxor.u32 %v1508, 2147483648
      %v1523 = vmul.f32 %v1522, 1.442695
      %v1524 = vpow.pop %v1523
      %v1525 = vadd.f32 %v1524, 1.0
      %v1526 = vrcp.pop %v1525
      %v1527 = vmul.f32 1.0, %v1526
      %v1528 = vmul.f32 %v1520, %v731
      %v1529 = vmul.f32 %v1514, %v1521
      %v1530 = vadd.f32 %v1528, %v1529
      %v1531 = vtanh.pop %v1530
      %v1532 = vmul.f32 %v1527, %v1531
      %s1533 = smul.addr %s1336, 4
      %s1534 = scalar_lea.vmem %s103, %s1533
      %v1535 = vld [vmem:[%s1534] sm:$0xf]
      %v1536 = vpack.c.bf16 %v1334, %v1334
      %1537 = vmatprep.subr.bf16.mxu0 %v927
      %1538 = vmatpush1.bf16.msra.mxu0 %v926
      %1539 = vmatprep.subr.bf16.mxu0 %v923
      %1540 = vmatpush1.bf16.msra.mxu0 %v922
      %1541 = vmatprep.subr.bf16.mxu0 %v919
      %1542 = vmatpush1.bf16.msra.mxu0 %v918
      %1543 = vmatprep.subr.bf16.mxu0 %v915
      %1544 = vmatpush1.bf16.msra.mxu0 %v914
      %1545 = vmatprep.subr.bf16.mxu0 %v911
      %1546 = vmatpush1.bf16.msra.mxu0 %v910
      %1547 = vmatprep.subr.bf16.mxu0 %v907
      %1548 = vmatpush1.bf16.msra.mxu0 %v906
      %1549 = vmatprep.subr.bf16.mxu0 %v903
      %1550 = vmatpush1.bf16.msra.mxu0 %v902
      %1551 = vmatprep.subr.bf16.mxu0 %v899
      %1552 = vmatpush1.bf16.msra.mxu0 %v898
      %1553 = vmatprep.subr.bf16.mxu0 0
      %1554 = vmatpush2.bf16.msra.mxu0 0
      %1555 = vmatprep.subr.bf16.mxu0 0
      %1556 = vmatpush2.bf16.msra.mxu0 0
      %1557 = vmatprep.subr.bf16.mxu0 0
      %1558 = vmatpush2.bf16.msra.mxu0 0
      %1559 = vmatprep.subr.bf16.mxu0 0
      %1560 = vmatpush2.bf16.msra.mxu0 0
      %1561 = vmatprep.subr.bf16.mxu0 0
      %1562 = vmatpush2.bf16.msra.mxu0 0
      %1563 = vmatprep.subr.bf16.mxu0 0
      %1564 = vmatpush2.bf16.msra.mxu0 0
      %1565 = vmatprep.subr.bf16.mxu0 0
      %1566 = vmatpush2.bf16.msra.mxu0 0
      %1567 = vmatprep.subr.bf16.mxu0 0
      %1568 = vmatpush2.bf16.msra.mxu0 0
      %1569 = vmatprep.mubr.bf16.mxu0 0
      %1570 = vmatmul.mubr.bf16.gmra.mxu0 %v1536
      %v1571 = vpop.f32.mrf.mxu0
      %v1572 = vadd.f32 0.0, %v1571
      %v1573 = vpop.f32.mrf.mxu0
      %v1574 = vadd.f32 0.0, %v1573
      %v1575 = vpop.f32.mrf.mxu0
      %v1576 = vpop.f32.mrf.mxu0
      %1577 = vdwg.mxu0
      %1578 = vmatprep.subr.bf16.mxu0 %v929
      %1579 = vmatpush1.bf16.msra.mxu0 %v928
      %1580 = vmatprep.subr.bf16.mxu0 %v925
      %1581 = vmatpush1.bf16.msra.mxu0 %v924
      %1582 = vmatprep.subr.bf16.mxu0 %v921
      %1583 = vmatpush1.bf16.msra.mxu0 %v920
      %1584 = vmatprep.subr.bf16.mxu0 %v917
      %1585 = vmatpush1.bf16.msra.mxu0 %v916
      %1586 = vmatprep.subr.bf16.mxu0 %v913
      %1587 = vmatpush1.bf16.msra.mxu0 %v912
      %1588 = vmatprep.subr.bf16.mxu0 %v909
      %1589 = vmatpush1.bf16.msra.mxu0 %v908
      %1590 = vmatprep.subr.bf16.mxu0 %v905
      %1591 = vmatpush1.bf16.msra.mxu0 %v904
      %1592 = vmatprep.subr.bf16.mxu0 %v901
      %1593 = vmatpush1.bf16.msra.mxu0 %v900
      %1594 = vmatprep.subr.bf16.mxu0 0
      %1595 = vmatpush2.bf16.msra.mxu0 0
      %1596 = vmatprep.subr.bf16.mxu0 0
      %1597 = vmatpush2.bf16.msra.mxu0 0
      %1598 = vmatprep.subr.bf16.mxu0 0
      %1599 = vmatpush2.bf16.msra.mxu0 0
      %1600 = vmatprep.subr.bf16.mxu0 0
      %1601 = vmatpush2.bf16.msra.mxu0 0
      %1602 = vmatprep.subr.bf16.mxu0 0
      %1603 = vmatpush2.bf16.msra.mxu0 0
      %1604 = vmatprep.subr.bf16.mxu0 0
      %1605 = vmatpush2.bf16.msra.mxu0 0
      %1606 = vmatprep.subr.bf16.mxu0 0
      %1607 = vmatpush2.bf16.msra.mxu0 0
      %1608 = vmatprep.subr.bf16.mxu0 0
      %1609 = vmatpush2.bf16.msra.mxu0 0
      %1610 = vmatprep.mubr.bf16.mxu0 0
      %1611 = vmatmul.mubr.bf16.gmra.mxu0 %v1536
      %v1612 = vpop.f32.mrf.mxu0
      %v1613 = vadd.f32 0.0, %v1612
      %v1614 = vpop.f32.mrf.mxu0
      %v1615 = vadd.f32 0.0, %v1614
      %v1616 = vpop.f32.mrf.mxu0
      %v1617 = vpop.f32.mrf.mxu0
      %1618 = vdwg.mxu0
      %1619 = vmatprep.subr.bf16.mxu0 %v1169
      %1620 = vmatpush1.bf16.msra.mxu0 %v1168
      %1621 = vmatprep.subr.bf16.mxu0 %v1165
      %1622 = vmatpush1.bf16.msra.mxu0 %v1164
      %1623 = vmatprep.subr.bf16.mxu0 %v1161
      %1624 = vmatpush1.bf16.msra.mxu0 %v1160
      %1625 = vmatprep.subr.bf16.mxu0 %v1157
      %1626 = vmatpush1.bf16.msra.mxu0 %v1156
      %1627 = vmatprep.subr.bf16.mxu0 %v1153
      %1628 = vmatpush1.bf16.msra.mxu0 %v1152
      %1629 = vmatprep.subr.bf16.mxu0 %v1149
      %1630 = vmatpush1.bf16.msra.mxu0 %v1148
      %1631 = vmatprep.subr.bf16.mxu0 %v1145
      %1632 = vmatpush1.bf16.msra.mxu0 %v1144
      %1633 = vmatprep.subr.bf16.mxu0 %v1141
      %1634 = vmatpush1.bf16.msra.mxu0 %v1140
      %1635 = vmatprep.subr.bf16.mxu0 0
      %1636 = vmatpush2.bf16.msra.mxu0 0
      %1637 = vmatprep.subr.bf16.mxu0 0
      %1638 = vmatpush2.bf16.msra.mxu0 0
      %1639 = vmatprep.subr.bf16.mxu0 0
      %1640 = vmatpush2.bf16.msra.mxu0 0
      %1641 = vmatprep.subr.bf16.mxu0 0
      %1642 = vmatpush2.bf16.msra.mxu0 0
      %1643 = vmatprep.subr.bf16.mxu0 0
      %1644 = vmatpush2.bf16.msra.mxu0 0
      %1645 = vmatprep.subr.bf16.mxu0 0
      %1646 = vmatpush2.bf16.msra.mxu0 0
      %1647 = vmatprep.subr.bf16.mxu0 0
      %1648 = vmatpush2.bf16.msra.mxu0 0
      %1649 = vmatprep.subr.bf16.mxu0 0
      %1650 = vmatpush2.bf16.msra.mxu0 0
      %1651 = vmatprep.mubr.bf16.mxu0 0
      %1652 = vmatmul.mubr.bf16.gmra.mxu0 %v1535
      %v1653 = vpop.f32.mrf.mxu0
      %v1654 = vadd.f32 %v1572, %v1653
      %v1655 = vpop.f32.mrf.mxu0
      %v1656 = vadd.f32 %v1574, %v1655
      %v1657 = vpop.f32.mrf.mxu0
      %v1658 = vpop.f32.mrf.mxu0
      %1659 = vdwg.mxu0
      %1660 = vmatprep.subr.bf16.mxu0 %v1171
      %1661 = vmatpush1.bf16.msra.mxu0 %v1170
      %1662 = vmatprep.subr.bf16.mxu0 %v1167
      %1663 = vmatpush1.bf16.msra.mxu0 %v1166
      %1664 = vmatprep.subr.bf16.mxu0 %v1163
      %1665 = vmatpush1.bf16.msra.mxu0 %v1162
      %1666 = vmatprep.subr.bf16.mxu0 %v1159
      %1667 = vmatpush1.bf16.msra.mxu0 %v1158
      %1668 = vmatprep.subr.bf16.mxu0 %v1155
      %1669 = vmatpush1.bf16.msra.mxu0 %v1154
      %1670 = vmatprep.subr.bf16.mxu0 %v1151
      %1671 = vmatpush1.bf16.msra.mxu0 %v1150
      %1672 = vmatprep.subr.bf16.mxu0 %v1147
      %1673 = vmatpush1.bf16.msra.mxu0 %v1146
      %1674 = vmatprep.subr.bf16.mxu0 %v1143
      %1675 = vmatpush1.bf16.msra.mxu0 %v1142
      %1676 = vmatprep.subr.bf16.mxu0 0
      %1677 = vmatpush2.bf16.msra.mxu0 0
      %1678 = vmatprep.subr.bf16.mxu0 0
      %1679 = vmatpush2.bf16.msra.mxu0 0
      %1680 = vmatprep.subr.bf16.mxu0 0
      %1681 = vmatpush2.bf16.msra.mxu0 0
      %1682 = vmatprep.subr.bf16.mxu0 0
      %1683 = vmatpush2.bf16.msra.mxu0 0
      %1684 = vmatprep.subr.bf16.mxu0 0
      %1685 = vmatpush2.bf16.msra.mxu0 0
      %1686 = vmatprep.subr.bf16.mxu0 0
      %1687 = vmatpush2.bf16.msra.mxu0 0
      %1688 = vmatprep.subr.bf16.mxu0 0
      %1689 = vmatpush2.bf16.msra.mxu0 0
      %1690 = vmatprep.subr.bf16.mxu0 0
      %1691 = vmatpush2.bf16.msra.mxu0 0
      %1692 = vmatprep.mubr.bf16.mxu0 0
      %1693 = vmatmul.mubr.bf16.gmra.mxu0 %v1535
      %v1694 = vpop.f32.mrf.mxu0
      %v1695 = vadd.f32 %v1613, %v1694
      %v1696 = vpop.f32.mrf.mxu0
      %v1697 = vadd.f32 %v1615, %v1696
      %v1698 = vpop.f32.mrf.mxu0
      %v1699 = vpop.f32.mrf.mxu0
      %1700 = vdwg.mxu0
      %v1701 = vadd.f32 %v1654, %v1290
      %v1702 = vadd.f32 %v1656, %v1294
      %v1703 = vadd.f32 %v1695, %v1298
      %v1704 = vadd.f32 %v1697, %v1302
      %v1705 = vxor.u32 %v1701, 2147483648
      %v1706 = vmul.f32 %v1705, 1.442695
      %v1707 = vpow.pop %v1706
      %v1708 = vadd.f32 %v1707, 1.0
      %v1709 = vrcp.pop %v1708
      %v1710 = vmul.f32 1.0, %v1709
      %v1711 = vxor.u32 %v1702, 2147483648
      %v1712 = vmul.f32 %v1711, 1.442695
      %v1713 = vpow.pop %v1712
      %v1714 = vadd.f32 %v1713, 1.0
      %v1715 = vrcp.pop %v1714
      %v1716 = vmul.f32 1.0, %v1715
      %v1717 = vtanh.pop %v1703
      %v1718 = vxor.u32 %v1704, 2147483648
      %v1719 = vmul.f32 %v1718, 1.442695
      %v1720 = vpow.pop %v1719
      %v1721 = vadd.f32 %v1720, 1.0
      %v1722 = vrcp.pop %v1721
      %v1723 = vmul.f32 1.0, %v1722
      %v1724 = vmul.f32 %v1716, %v1332
      %v1725 = vmul.f32 %v1710, %v1717
      %v1726 = vadd.f32 %v1724, %v1725
      %v1727 = vtanh.pop %v1726
      %v1728 = vmul.f32 %v1723, %v1727
    $region58: #{bilstm_text_encoder.1} parent=1 // loop_footer
      %s126 = sadd.s32 1, %s122
    $region59: #{bilstm_text_encoder.1} parent=1 // loop_footer_branch
      %121 = sbr.rel target = $region55
    $region60: #{bilstm_text_encoder.1} parent=1 // loop_exit
      _
    %1729 = vst [vmem:[#allocation2] sm:$0xff] %v127
    %1730 = vst [vmem:[#allocation3] sm:$0xff] %v128
    %1731 = vst [vmem:[#allocation4] sm:$0xff] %v129
    %1732 = vst [vmem:[#allocation5] sm:$0xff] %v130
    // Predicated region
    $region61: #{bilstm_text_encoder.1} parent=1 // pred_check
      %p1733 = pneg %p107
    $region62: #{bilstm_text_encoder.1} parent=1 // pred_check_branch
      %1735 = sbr.rel (%p1733) target = $region64
    $region63: #{bilstm_text_encoder.1} parent=1 // pred_region
      %1736 = vst [vmem:[%s8] sm:$0xff] %v127
      %s1737 = scalar_lea.vmem %s8, 8
      %1738 = vst [vmem:[%s1737] sm:$0xff] %v129
    $region64: #{bilstm_text_encoder.1} parent=1 // pred_fallthru
      _
    // Predicated region
    $region65: #{bilstm_text_encoder.1} parent=1 // pred_check
      _
    $region66: #{bilstm_text_encoder.1} parent=1 // pred_check_branch
      %1740 = sbr.rel (0) target = $region68
    $region67: #{bilstm_text_encoder.1} parent=1 // pred_region
      _
    $region68: #{bilstm_text_encoder.1} parent=1 // pred_fallthru
      _
    // Predicated region
    $region69: #{bilstm_text_encoder.1} parent=1 // pred_check
      _
    $region70: #{bilstm_text_encoder.1} parent=1 // pred_check_branch
      %1742 = sbr.rel (0) target = $region72
    $region71: #{bilstm_text_encoder.1} parent=1 // pred_region
      _
    $region72: #{bilstm_text_encoder.1} parent=1 // pred_fallthru
      _
    %1743 = vsyncpa [#allocation7], 1
    %1744 = vsyncpa [#allocation9], 1
    %1745 = vsyncpa [#allocation12], 1

</llo_original>
